<compile_context>
chip_gen: v6e
topology: v6e:2x2x1
jax: 0.10.0
libtpu: 0.0.40
codegen_flags: <defaults>
</compile_context>

<pallas_src>
import math
import functools

import jax
import jax.numpy as jnp
import numpy as np
from jax import lax
from jax.experimental import pallas as pl
from jax.experimental.pallas import tpu as pltpu

NEG = -1e9         # additive "-inf" used for causal / key-padding masking (matches reference)
BLOCK_NEG = -3e9   # strictly dominates any stacked NEG combination -> cross-block exp == 0 exactly
LN_EPS = 1e-5


# ----------------------------------------------------------------------------
# Fused Pallas kernel: all decoder layers + final FC, one invocation, x resident in VMEM.
# ----------------------------------------------------------------------------
def fused_decoder_kernel(x_ref, tgtmask_ref, pad_ref, bidr_ref, bidc_ref,
                         wqkv_ref, bqkv_ref, wo_ref, bo_ref,
                         w1_ref, b1_ref, w2_ref, b2_ref,
                         ln1w_ref, ln1b_ref, ln2w_ref, ln2b_ref,
                         fcw_ref, fcb_ref, out_ref, *, nhead):
    L = wqkv_ref.shape[0]
    D = wqkv_ref.shape[1]
    BS = x_ref.shape[0]            # batch flattened into rows
    S = tgtmask_ref.shape[0]
    H = nhead
    hd = D // H
    HBS = H * BS                   # heads stacked on rows as well
    scale = 1.0 / math.sqrt(hd)

    # ---- additive attention mask over head-stacked rows, built in-kernel ONCE ----
    # row r = h*BS + b*S + i ; col c = h'*BS + b'*S + j
    #   * user tgt_mask term (causal)  : tgt_mask[i, j]  (tiled by static concat of the (S,S) block)
    #   * same-head & same-batch block : block-id(r) == block-id(c)  (ids precomputed, linear size)
    #   * key padding                  : pad_ref (1, H*BS) additive row
    tm = tgtmask_ref[...]                                           # (S, S) f32
    causal = jnp.concatenate([tm] * (HBS // S), axis=0)             # (HBS, S)
    causal = jnp.concatenate([causal] * (HBS // S), axis=1)         # (HBS, HBS)
    block = jnp.where(bidr_ref[...] == bidc_ref[...], 0.0, BLOCK_NEG)   # (HBS,1)==(1,HBS)
    mask = causal + block + pad_ref[...]                            # (HBS, HBS) f32

    # TODO(synk): dropout (pos_dropout / trans_dropout) is identity in eval mode; not modeled.
    def layer(l, x):
        xb = x.astype(jnp.bfloat16)

        # fused QKV projection: ONE (BS,D)x(D,3D) MXU pass + single bias broadcast
        qkv = jnp.dot(xb, wqkv_ref[l], preferred_element_type=jnp.float32) + bqkv_ref[l]

        # head-stack Q/K/V on the sublane (row) axis -> (H*BS, hd); static lane slices only
        qs = jnp.concatenate([qkv[:, h * hd:(h + 1) * hd] for h in range(H)],
                             axis=0).astype(jnp.bfloat16)
        ks = jnp.concatenate([qkv[:, D + h * hd:D + (h + 1) * hd] for h in range(H)],
                             axis=0).astype(jnp.bfloat16)
        vs = jnp.concatenate([qkv[:, 2 * D + h * hd:2 * D + (h + 1) * hd] for h in range(H)],
                             axis=0).astype(jnp.bfloat16)

        # ONE block-diagonal score matmul + ONE context matmul for ALL heads
        s = lax.dot_general(qs, ks, (((1,), (1,)), ((), ())),
                            preferred_element_type=jnp.float32)     # (HBS, HBS)
        s = s * scale + mask
        s = s - jnp.max(s, axis=-1, keepdims=True)
        p = jnp.exp(s)
        p = p * pl.reciprocal(jnp.sum(p, axis=-1, keepdims=True), approx=True)
        ctxs = jnp.dot(p.astype(jnp.bfloat16), vs,
                       preferred_element_type=jnp.float32)           # (HBS, hd)

        # reassemble heads onto the lane axis -> (BS, D); ONE full (D,D) out-projection
        ctx = jnp.concatenate([ctxs[h * BS:(h + 1) * BS, :] for h in range(H)],
                              axis=1).astype(jnp.bfloat16)
        attn = jnp.dot(ctx, wo_ref[l], preferred_element_type=jnp.float32) + bo_ref[l]

        # residual + LayerNorm 1 (f32)
        x1 = x + attn
        mu1 = jnp.mean(x1, axis=-1, keepdims=True)
        var1 = jnp.mean((x1 - mu1) ** 2, axis=-1, keepdims=True)
        x1 = (x1 - mu1) * lax.rsqrt(var1 + LN_EPS) * ln1w_ref[l] + ln1b_ref[l]

        # feed-forward (ReLU), bf16 matmuls / f32 accumulation
        h1 = jnp.dot(x1.astype(jnp.bfloat16), w1_ref[l],
                     preferred_element_type=jnp.float32) + b1_ref[l]
        h1 = jnp.maximum(h1, 0.0)
        ff = jnp.dot(h1.astype(jnp.bfloat16), w2_ref[l],
                     preferred_element_type=jnp.float32) + b2_ref[l]

        # residual + LayerNorm 2 (f32)
        x2 = x1 + ff
        mu2 = jnp.mean(x2, axis=-1, keepdims=True)
        var2 = jnp.mean((x2 - mu2) ** 2, axis=-1, keepdims=True)
        return (x2 - mu2) * lax.rsqrt(var2 + LN_EPS) * ln2w_ref[l] + ln2b_ref[l]

    # rolled layer loop: constant register pressure / compile time as L grows
    x = lax.fori_loop(0, L, layer, x_ref[...])

    # final vocab projection; output lane-dense (V padded to a multiple of 128)
    out_ref[...] = jnp.dot(x.astype(jnp.bfloat16), fcw_ref[...],
                           preferred_element_type=jnp.float32) + fcb_ref[...]


# ----------------------------------------------------------------------------
# Forward wrapper (glue: embeddings, position encoding, linear-size mask pieces, kernel call)
# ----------------------------------------------------------------------------
@functools.partial(jax.jit, static_argnames=('vocab', 'nhead'))
def decoder_transformer_forward(packed, tgt, con_token, tgt_key_padding_mask, tgt_mask,
                                *, vocab, nhead):
    embed = packed['embed']
    pos = packed['pos']
    B, S = tgt.shape
    D = embed.shape[1]
    BS = B * S
    HBS = nhead * BS

    # embeddings + condition-token sum + scale + learned positional encoding
    emb = embed[tgt]                              # (B, S, D)
    con_emb = embed[con_token].sum(axis=1)        # (B, D)
    x = (emb + con_emb[:, None, :]) * math.sqrt(D) + pos[:S][None, :, :]
    x2d = x.reshape(BS, D).astype(jnp.float32)

    # linear-size mask pieces (the quadratic (HBS,HBS) mask is built inside the kernel):
    pad = jnp.where(tgt_key_padding_mask.reshape(-1), NEG, 0.0).astype(jnp.float32)   # (BS,)
    pad_row = jnp.tile(pad, (nhead,))[None, :]                                        # (1, HBS)
    bid = jnp.arange(HBS, dtype=jnp.int32) // S   # same head AND same batch <=> same block id
    bid_r = bid[:, None]                          # (HBS, 1)
    bid_c = bid[None, :]                          # (1, HBS)

    L = packed['wqkv'].shape[0]
    threeD = packed['wqkv'].shape[2]
    dff = packed['w1'].shape[2]
    hd = D // nhead
    Vp = packed['fc_w'].shape[1]

    args = (x2d, tgt_mask.astype(jnp.float32), pad_row, bid_r, bid_c,
            packed['wqkv'], packed['bqkv'], packed['wo'], packed['bo'],
            packed['w1'], packed['b1'], packed['w2'], packed['b2'],
            packed['ln1w'], packed['ln1b'], packed['ln2w'], packed['ln2b'],
            packed['fc_w'], packed['fc_b'])

    # advisory cost estimate so XLA can overlap the custom call with surrounding gathers
    flops_layer = (2 * BS * D * threeD            # fused QKV
                   + 2 * HBS * hd * HBS           # block-diagonal scores
                   + 2 * HBS * HBS * hd           # block-diagonal context
                   + 2 * BS * D * D               # out-proj
                   + 4 * BS * D * dff)            # FFN
    flops = int(L * flops_layer + 2 * BS * D * Vp)
    transcendentals = int(L * (HBS * HBS + 2 * BS))
    bytes_accessed = int(sum(int(a.size) * a.dtype.itemsize for a in args) + BS * Vp * 4)
    cost = pl.CostEstimate(flops=flops, transcendentals=transcendentals,
                           bytes_accessed=bytes_accessed)

    # explicit VMEM budget (generous headroom at these sizes; clamped well under v7x's 64 MiB)
    vmem_limit = int(min(48 * 1024 * 1024, max(4 * 1024 * 1024, 8 * bytes_accessed)))

    # Single fused invocation; all operands (a few hundred KiB total) live fully in VMEM.
    # TODO(synk): at production BS, add a row-tiled grid with dimension_semantics=("parallel",)
    #             (weights index_map -> block 0) so v7x's second TensorCore is used and score /
    #             activation residency is bounded against its 64 MiB VMEM.
    logits_p = pl.pallas_call(
        functools.partial(fused_decoder_kernel, nhead=nhead),
        out_shape=jax.ShapeDtypeStruct((BS, Vp), jnp.float32),
        compiler_params=pltpu.CompilerParams(vmem_limit_bytes=vmem_limit),
        cost_estimate=cost,
    )(*args)

    return logits_p[:, :vocab].reshape(B, S, vocab)


# ----------------------------------------------------------------------------
# Parameter packing: per-layer stacked, lane-dense fused weights, bf16 matmul operands,
# padded vocab. Head ordering matches PyTorch in_proj / out_proj layout.
# ----------------------------------------------------------------------------
def pack_params(params):
    V = params['fc_w_t'].shape[1]
    Vp = ((V + 127) // 128) * 128

    def stack(fn):
        return jnp.stack([fn(lp) for lp in params['layers']])

    return {
        'embed': params['embed'],
        'pos': params['pos'],
        'wqkv': stack(lambda lp: lp['in_w_t']).astype(jnp.bfloat16),   # (L, D, 3D) lane-dense
        'bqkv': stack(lambda lp: lp['in_b']),                          # (L, 1, 3D)
        'wo': stack(lambda lp: lp['out_w_t']).astype(jnp.bfloat16),    # (L, D, D)
        'bo': stack(lambda lp: lp['out_b']),                           # (L, 1, D)
        'w1': stack(lambda lp: lp['ff1_w_t']).astype(jnp.bfloat16),    # (L, D, dff)
        'b1': stack(lambda lp: lp['ff1_b']),
        'w2': stack(lambda lp: lp['ff2_w_t']).astype(jnp.bfloat16),    # (L, dff, D)
        'b2': stack(lambda lp: lp['ff2_b']),
        'ln1w': stack(lambda lp: lp['ln1_w']),
        'ln1b': stack(lambda lp: lp['ln1_b']),
        'ln2w': stack(lambda lp: lp['ln2_w']),
        'ln2b': stack(lambda lp: lp['ln2_b']),
        'fc_w': jnp.pad(params['fc_w_t'], ((0, 0), (0, Vp - V))).astype(jnp.bfloat16),
        'fc_b': jnp.pad(params['fc_b'], ((0, 0), (0, Vp - V))),
    }


# ----------------------------------------------------------------------------
# Pure-JAX f32 reference (for correctness check)
# ----------------------------------------------------------------------------
def _layernorm(x, w, b):
    mu = jnp.mean(x, axis=-1, keepdims=True)
    var = jnp.mean((x - mu) ** 2, axis=-1, keepdims=True)
    return (x - mu) * lax.rsqrt(var + LN_EPS) * w + b


def reference_forward(params, tgt, con_token, tgt_key_padding_mask, tgt_mask, *, nhead):
    d_model = params['embed'].shape[1]
    B, S = tgt.shape
    D = d_model
    hd = D // nhead

    emb = params['embed'][tgt]
    con_emb = params['embed'][con_token].sum(axis=1)
    x = (emb + con_emb[:, None, :]) * math.sqrt(d_model)
    x = x + params['pos'][:S][None, :, :]

    pad_add = jnp.where(tgt_key_padding_mask, NEG, 0.0).astype(jnp.float32)
    mask = tgt_mask[None, :, :] + pad_add[:, None, :]

    for lp in params['layers']:
        qkv = x @ lp['in_w_t'] + lp['in_b']
        q, k, v = qkv[..., :D], qkv[..., D:2 * D], qkv[..., 2 * D:]
        q = q.reshape(B, S, nhead, hd)
        k = k.reshape(B, S, nhead, hd)
        v = v.reshape(B, S, nhead, hd)
        s = jnp.einsum('bqhd,bkhd->bhqk', q, k) / math.sqrt(hd) + mask[:, None]
        p = jax.nn.softmax(s, axis=-1)
        ctx = jnp.einsum('bhqk,bkhd->bqhd', p, v).reshape(B, S, D)
        attn = ctx @ lp['out_w_t'] + lp['out_b']
        x1 = _layernorm(x + attn, lp['ln1_w'], lp['ln1_b'])
        ff = jnp.maximum(x1 @ lp['ff1_w_t'] + lp['ff1_b'], 0.0) @ lp['ff2_w_t'] + lp['ff2_b']
        x = _layernorm(x1 + ff, lp['ln2_w'], lp['ln2_b'])

    return x @ params['fc_w_t'] + params['fc_b']


# ----------------------------------------------------------------------------
# Deterministic parameter init (shapes per module __init__; weights stored
# pre-transposed for right-multiplication, biases/LN params as (1, n))
# ----------------------------------------------------------------------------
def init_params(key, vocab, d_model, nhead, nlayers, dff, max_len):
    keys = jax.random.split(key, 4 + nlayers)

    def nrm(k, shape, scale=0.02):
        return jax.random.normal(k, shape, jnp.float32) * scale

    params = {
        'embed': nrm(keys[0], (vocab, d_model), 0.1),      # nn.Embedding(vocab, d_model)
        'pos': nrm(keys[1], (max_len, d_model), 0.1),      # LearnedPositionEncoding(max_len, d_model)
        'fc_w_t': nrm(keys[2], (d_model, vocab)),          # nn.Linear(d_model, vocab)  (transposed)
        'fc_b': jnp.zeros((1, vocab), jnp.float32),
        'layers': [],
    }
    for i in range(nlayers):
        lk = jax.random.split(keys[4 + i], 6)
        params['layers'].append({
            'in_w_t': nrm(lk[0], (d_model, 3 * d_model)),   # MHA in_proj (transposed)
            'in_b': nrm(lk[1], (1, 3 * d_model), 0.01),
            'out_w_t': nrm(lk[2], (d_model, d_model)),      # MHA out_proj (transposed)
            'out_b': jnp.zeros((1, d_model), jnp.float32),
            'ff1_w_t': nrm(lk[3], (d_model, dff)),          # linear1 (transposed)
            'ff1_b': jnp.zeros((1, dff), jnp.float32),
            'ff2_w_t': nrm(lk[4], (dff, d_model)),          # linear2 (transposed)
            'ff2_b': jnp.zeros((1, d_model), jnp.float32),
            'ln1_w': jnp.ones((1, d_model), jnp.float32),
            'ln1_b': jnp.zeros((1, d_model), jnp.float32),
            'ln2_w': jnp.ones((1, d_model), jnp.float32),
            'ln2_b': jnp.zeros((1, d_model), jnp.float32),
        })
    return params


# ----------------------------------------------------------------------------
if __name__ == "__main__":
    vocab_size, d_model, nhead, num_layers, dim_ff, max_len = 40, 64, 4, 2, 128, 16
    B, S, C = 2, 8, 3  # batch, target seq len, number of condition tokens

    key = jax.random.PRNGKey(0)
    kp, k1, k2 = jax.random.split(key, 3)
    params = init_params(kp, vocab_size, d_model, nhead, num_layers, dim_ff, max_len)
    packed = pack_params(params)

    tgt = jax.random.randint(k1, (B, S), 0, vocab_size, dtype=jnp.int32)
    con_token = jax.random.randint(k2, (B, C), 0, vocab_size, dtype=jnp.int32)
    # True == padded position (PyTorch key_padding_mask convention)
    tgt_key_padding_mask = jnp.zeros((B, S), dtype=bool).at[1, S - 1].set(True)
    # causal additive mask (0 on/below diagonal, -inf above; -1e9 used as -inf)
    tgt_mask = jnp.where(jnp.triu(jnp.ones((S, S), dtype=bool), k=1), NEG, 0.0).astype(jnp.float32)

    out = decoder_transformer_forward(packed, tgt, con_token,
                                      tgt_key_padding_mask, tgt_mask,
                                      vocab=vocab_size, nhead=nhead)
    out = jax.block_until_ready(out)

    ref = reference_forward(params, tgt, con_token,
                            tgt_key_padding_mask, tgt_mask, nhead=nhead)

    assert out.shape == (B, S, vocab_size), out.shape
    np.testing.assert_allclose(np.asarray(out), np.asarray(ref), rtol=2e-2, atol=2e-2)
    print("KERNEL_OK")
</pallas_src>

<mosaic_0001>
module attributes {stable_mosaic.version = 11 : i64} {
  func.func @fused_decoder_kernel(%arg0: memref<16x64xf32, #tpu.memory_space<vmem>>, %arg1: memref<8x8xf32, #tpu.memory_space<vmem>>, %arg2: memref<1x64xf32, #tpu.memory_space<vmem>>, %arg3: memref<64x1xi32, #tpu.memory_space<vmem>>, %arg4: memref<1x64xi32, #tpu.memory_space<vmem>>, %arg5: memref<2x64x192xbf16, #tpu.memory_space<vmem>>, %arg6: memref<2x1x192xf32, #tpu.memory_space<vmem>>, %arg7: memref<2x64x64xbf16, #tpu.memory_space<vmem>>, %arg8: memref<2x1x64xf32, #tpu.memory_space<vmem>>, %arg9: memref<2x64x128xbf16, #tpu.memory_space<vmem>>, %arg10: memref<2x1x128xf32, #tpu.memory_space<vmem>>, %arg11: memref<2x128x64xbf16, #tpu.memory_space<vmem>>, %arg12: memref<2x1x64xf32, #tpu.memory_space<vmem>>, %arg13: memref<2x1x64xf32, #tpu.memory_space<vmem>>, %arg14: memref<2x1x64xf32, #tpu.memory_space<vmem>>, %arg15: memref<2x1x64xf32, #tpu.memory_space<vmem>>, %arg16: memref<2x1x64xf32, #tpu.memory_space<vmem>>, %arg17: memref<64x128xbf16, #tpu.memory_space<vmem>>, %arg18: memref<1x128xf32, #tpu.memory_space<vmem>>, %arg19: memref<16x128xf32, #tpu.memory_space<vmem>>) attributes {dimension_semantics = [], scalar_prefetch = 0 : i64, scratch_operands = 0 : i64, tpu.core_type = #tpu.core_type<tc>} {
    %c0 = arith.constant 0 : index
    %c0_0 = arith.constant 0 : index
    %0 = vector.load %arg1[%c0, %c0_0] : memref<8x8xf32, #tpu.memory_space<vmem>>, vector<8x8xf32>
    %1 = tpu.concatenate %0, %0, %0, %0, %0, %0, %0, %0 in 0 : vector<8x8xf32>, vector<8x8xf32>, vector<8x8xf32>, vector<8x8xf32>, vector<8x8xf32>, vector<8x8xf32>, vector<8x8xf32>, vector<8x8xf32> -> vector<64x8xf32>
    %2 = tpu.concatenate %1, %1, %1, %1, %1, %1, %1, %1 in 1 : vector<64x8xf32>, vector<64x8xf32>, vector<64x8xf32>, vector<64x8xf32>, vector<64x8xf32>, vector<64x8xf32>, vector<64x8xf32>, vector<64x8xf32> -> vector<64x64xf32>
    %c0_1 = arith.constant 0 : index
    %c0_2 = arith.constant 0 : index
    %3 = vector.load %arg3[%c0_1, %c0_2] : memref<64x1xi32, #tpu.memory_space<vmem>>, vector<64x1xi32>
    %c0_3 = arith.constant 0 : index
    %c0_4 = arith.constant 0 : index
    %4 = vector.load %arg4[%c0_3, %c0_4] : memref<1x64xi32, #tpu.memory_space<vmem>>, vector<1x64xi32>
    %5 = vector.broadcast %3 : vector<64x1xi32> to vector<64x64xi32>
    %6 = vector.broadcast %4 : vector<1x64xi32> to vector<64x64xi32>
    %7 = arith.cmpi eq, %5, %6 : vector<64x64xi32>
    %cst = arith.constant 0.000000e+00 : f32
    %cst_5 = arith.constant -3.000000e+09 : f32
    %8 = vector.broadcast %cst : f32 to vector<64x64xf32>
    %9 = vector.broadcast %cst_5 : f32 to vector<64x64xf32>
    %10 = arith.select %7, %8, %9 : vector<64x64xi1>, vector<64x64xf32>
    %11 = arith.addf %2, %10 : vector<64x64xf32>
    %c0_6 = arith.constant 0 : index
    %c0_7 = arith.constant 0 : index
    %12 = vector.load %arg2[%c0_6, %c0_7] : memref<1x64xf32, #tpu.memory_space<vmem>>, vector<1x64xf32>
    %13 = vector.broadcast %12 : vector<1x64xf32> to vector<64x64xf32>
    %14 = arith.addf %11, %13 : vector<64x64xf32>
    %c0_8 = arith.constant 0 : index
    %c0_9 = arith.constant 0 : index
    %15 = vector.load %arg0[%c0_8, %c0_9] : memref<16x64xf32, #tpu.memory_space<vmem>>, vector<16x64xf32>
    %c0_i32 = arith.constant 0 : i32
    %c2_i32 = arith.constant 2 : i32
    %16 = arith.addi %c0_i32, %c2_i32 : i32
    %c1_i32 = arith.constant 1 : i32
    %17 = scf.for %arg20 = %c0_i32 to %16 step %c1_i32 iter_args(%arg21 = %15) -> (vector<16x64xf32>)  : i32 {
      %25 = arith.truncf %arg21 : vector<16x64xf32> to vector<16x64xbf16>
      %26 = arith.index_cast %arg20 : i32 to index
      %c0_18 = arith.constant 0 : index
      %c0_19 = arith.constant 0 : index
      %27 = vector.load %arg5[%26, %c0_18, %c0_19] : memref<2x64x192xbf16, #tpu.memory_space<vmem>>, vector<1x64x192xbf16>
      %28 = vector.shape_cast %27 : vector<1x64x192xbf16> to vector<64x192xbf16>
      %cst_20 = arith.constant dense<0.000000e+00> : vector<16x192xf32>
      %29 = tpu.matmul %25, %28, %cst_20 {dimension_numbers = #tpu.dot_dimension_numbers<[1], [0], [0], [1], [0, 0, 1, 1], [], []>} : vector<16x64xbf16>, vector<64x192xbf16>, vector<16x192xf32> -> vector<16x192xf32>
      %30 = arith.index_cast %arg20 : i32 to index
      %c0_21 = arith.constant 0 : index
      %c0_22 = arith.constant 0 : index
      %31 = vector.load %arg6[%30, %c0_21, %c0_22] : memref<2x1x192xf32, #tpu.memory_space<vmem>>, vector<1x1x192xf32>
      %32 = vector.shape_cast %31 : vector<1x1x192xf32> to vector<1x192xf32>
      %33 = vector.broadcast %32 : vector<1x192xf32> to vector<16x192xf32>
      %34 = arith.addf %29, %33 : vector<16x192xf32>
      %35 = vector.extract_strided_slice %34 {offsets = [0, 0], sizes = [16, 16], strides = [1, 1]} : vector<16x192xf32> to vector<16x16xf32>
      %36 = vector.extract_strided_slice %34 {offsets = [0, 16], sizes = [16, 16], strides = [1, 1]} : vector<16x192xf32> to vector<16x16xf32>
      %37 = vector.extract_strided_slice %34 {offsets = [0, 32], sizes = [16, 16], strides = [1, 1]} : vector<16x192xf32> to vector<16x16xf32>
      %38 = vector.extract_strided_slice %34 {offsets = [0, 48], sizes = [16, 16], strides = [1, 1]} : vector<16x192xf32> to vector<16x16xf32>
      %39 = tpu.concatenate %35, %36, %37, %38 in 0 : vector<16x16xf32>, vector<16x16xf32>, vector<16x16xf32>, vector<16x16xf32> -> vector<64x16xf32>
      %40 = arith.truncf %39 : vector<64x16xf32> to vector<64x16xbf16>
      %41 = vector.extract_strided_slice %34 {offsets = [0, 64], sizes = [16, 16], strides = [1, 1]} : vector<16x192xf32> to vector<16x16xf32>
      %42 = vector.extract_strided_slice %34 {offsets = [0, 80], sizes = [16, 16], strides = [1, 1]} : vector<16x192xf32> to vector<16x16xf32>
      %43 = vector.extract_strided_slice %34 {offsets = [0, 96], sizes = [16, 16], strides = [1, 1]} : vector<16x192xf32> to vector<16x16xf32>
      %44 = vector.extract_strided_slice %34 {offsets = [0, 112], sizes = [16, 16], strides = [1, 1]} : vector<16x192xf32> to vector<16x16xf32>
      %45 = tpu.concatenate %41, %42, %43, %44 in 0 : vector<16x16xf32>, vector<16x16xf32>, vector<16x16xf32>, vector<16x16xf32> -> vector<64x16xf32>
      %46 = arith.truncf %45 : vector<64x16xf32> to vector<64x16xbf16>
      %47 = vector.extract_strided_slice %34 {offsets = [0, 128], sizes = [16, 16], strides = [1, 1]} : vector<16x192xf32> to vector<16x16xf32>
      %48 = vector.extract_strided_slice %34 {offsets = [0, 144], sizes = [16, 16], strides = [1, 1]} : vector<16x192xf32> to vector<16x16xf32>
      %49 = vector.extract_strided_slice %34 {offsets = [0, 160], sizes = [16, 16], strides = [1, 1]} : vector<16x192xf32> to vector<16x16xf32>
      %50 = vector.extract_strided_slice %34 {offsets = [0, 176], sizes = [16, 16], strides = [1, 1]} : vector<16x192xf32> to vector<16x16xf32>
      %51 = tpu.concatenate %47, %48, %49, %50 in 0 : vector<16x16xf32>, vector<16x16xf32>, vector<16x16xf32>, vector<16x16xf32> -> vector<64x16xf32>
      %52 = arith.truncf %51 : vector<64x16xf32> to vector<64x16xbf16>
      %cst_23 = arith.constant dense<0.000000e+00> : vector<64x64xf32>
      %53 = tpu.matmul %40, %46, %cst_23 {dimension_numbers = #tpu.dot_dimension_numbers<[1], [1], [0], [0], [0, 0, 1, 0], [], []>} : vector<64x16xbf16>, vector<64x16xbf16>, vector<64x64xf32> -> vector<64x64xf32>
      %cst_24 = arith.constant 2.500000e-01 : f32
      %54 = vector.broadcast %cst_24 : f32 to vector<64x64xf32>
      %55 = arith.mulf %53, %54 : vector<64x64xf32>
      %56 = arith.addf %55, %14 : vector<64x64xf32>
      %cst_25 = arith.constant dense<0xFF800000> : vector<64xf32>
      %57 = vector.multi_reduction <maximumf>, %56, %cst_25 [1] : vector<64x64xf32> to vector<64xf32>
      %58 = vector.shape_cast %57 : vector<64xf32> to vector<64x1xf32>
      %59 = vector.broadcast %58 : vector<64x1xf32> to vector<64x64xf32>
      %60 = arith.subf %56, %59 : vector<64x64xf32>
      %61 = math.exp %60 : vector<64x64xf32>
      %cst_26 = arith.constant dense<0.000000e+00> : vector<64xf32>
      %62 = vector.multi_reduction <add>, %61, %cst_26 [1] : vector<64x64xf32> to vector<64xf32>
      %63 = vector.shape_cast %62 : vector<64xf32> to vector<64x1xf32>
      %64 = tpu.reciprocal %63 {approx = true} : vector<64x1xf32> -> vector<64x1xf32>
      %65 = vector.broadcast %64 : vector<64x1xf32> to vector<64x64xf32>
      %66 = arith.mulf %61, %65 : vector<64x64xf32>
      %67 = arith.truncf %66 : vector<64x64xf32> to vector<64x64xbf16>
      %cst_27 = arith.constant dense<0.000000e+00> : vector<64x16xf32>
      %68 = tpu.matmul %67, %52, %cst_27 {dimension_numbers = #tpu.dot_dimension_numbers<[1], [0], [0], [1], [0, 0, 1, 1], [], []>} : vector<64x64xbf16>, vector<64x16xbf16>, vector<64x16xf32> -> vector<64x16xf32>
      %69 = vector.extract_strided_slice %68 {offsets = [0, 0], sizes = [16, 16], strides = [1, 1]} : vector<64x16xf32> to vector<16x16xf32>
      %70 = vector.extract_strided_slice %68 {offsets = [16, 0], sizes = [16, 16], strides = [1, 1]} : vector<64x16xf32> to vector<16x16xf32>
      %71 = vector.extract_strided_slice %68 {offsets = [32, 0], sizes = [16, 16], strides = [1, 1]} : vector<64x16xf32> to vector<16x16xf32>
      %72 = vector.extract_strided_slice %68 {offsets = [48, 0], sizes = [16, 16], strides = [1, 1]} : vector<64x16xf32> to vector<16x16xf32>
      %73 = tpu.concatenate %69, %70, %71, %72 in 1 : vector<16x16xf32>, vector<16x16xf32>, vector<16x16xf32>, vector<16x16xf32> -> vector<16x64xf32>
      %74 = arith.truncf %73 : vector<16x64xf32> to vector<16x64xbf16>
      %75 = arith.index_cast %arg20 : i32 to index
      %c0_28 = arith.constant 0 : index
      %c0_29 = arith.constant 0 : index
      %76 = vector.load %arg7[%75, %c0_28, %c0_29] : memref<2x64x64xbf16, #tpu.memory_space<vmem>>, vector<1x64x64xbf16>
      %77 = vector.shape_cast %76 : vector<1x64x64xbf16> to vector<64x64xbf16>
      %cst_30 = arith.constant dense<0.000000e+00> : vector<16x64xf32>
      %78 = tpu.matmul %74, %77, %cst_30 {dimension_numbers = #tpu.dot_dimension_numbers<[1], [0], [0], [1], [0, 0, 1, 1], [], []>} : vector<16x64xbf16>, vector<64x64xbf16>, vector<16x64xf32> -> vector<16x64xf32>
      %79 = arith.index_cast %arg20 : i32 to index
      %c0_31 = arith.constant 0 : index
      %c0_32 = arith.constant 0 : index
      %80 = vector.load %arg8[%79, %c0_31, %c0_32] : memref<2x1x64xf32, #tpu.memory_space<vmem>>, vector<1x1x64xf32>
      %81 = vector.shape_cast %80 : vector<1x1x64xf32> to vector<1x64xf32>
      %82 = vector.broadcast %81 : vector<1x64xf32> to vector<16x64xf32>
      %83 = arith.addf %78, %82 : vector<16x64xf32>
      %84 = arith.addf %arg21, %83 : vector<16x64xf32>
      %cst_33 = arith.constant dense<0.000000e+00> : vector<16xf32>
      %85 = vector.multi_reduction <add>, %84, %cst_33 [1] : vector<16x64xf32> to vector<16xf32>
      %86 = vector.shape_cast %85 : vector<16xf32> to vector<16x1xf32>
      %cst_34 = arith.constant 6.400000e+01 : f32
      %87 = vector.broadcast %cst_34 : f32 to vector<16x1xf32>
      %88 = arith.divf %86, %87 : vector<16x1xf32>
      %89 = vector.broadcast %88 : vector<16x1xf32> to vector<16x64xf32>
      %90 = arith.subf %84, %89 : vector<16x64xf32>
      %91 = arith.mulf %90, %90 : vector<16x64xf32>
      %cst_35 = arith.constant dense<0.000000e+00> : vector<16xf32>
      %92 = vector.multi_reduction <add>, %91, %cst_35 [1] : vector<16x64xf32> to vector<16xf32>
      %93 = vector.shape_cast %92 : vector<16xf32> to vector<16x1xf32>
      %cst_36 = arith.constant 6.400000e+01 : f32
      %94 = vector.broadcast %cst_36 : f32 to vector<16x1xf32>
      %95 = arith.divf %93, %94 : vector<16x1xf32>
      %96 = vector.broadcast %88 : vector<16x1xf32> to vector<16x64xf32>
      %97 = arith.subf %84, %96 : vector<16x64xf32>
      %cst_37 = arith.constant 9.99999974E-6 : f32
      %98 = vector.broadcast %cst_37 : f32 to vector<16x1xf32>
      %99 = arith.addf %95, %98 : vector<16x1xf32>
      %100 = math.rsqrt %99 : vector<16x1xf32>
      %101 = vector.broadcast %100 : vector<16x1xf32> to vector<16x64xf32>
      %102 = arith.mulf %97, %101 : vector<16x64xf32>
      %103 = arith.index_cast %arg20 : i32 to index
      %c0_38 = arith.constant 0 : index
      %c0_39 = arith.constant 0 : index
      %104 = vector.load %arg13[%103, %c0_38, %c0_39] : memref<2x1x64xf32, #tpu.memory_space<vmem>>, vector<1x1x64xf32>
      %105 = vector.shape_cast %104 : vector<1x1x64xf32> to vector<1x64xf32>
      %106 = vector.broadcast %105 : vector<1x64xf32> to vector<16x64xf32>
      %107 = arith.mulf %102, %106 : vector<16x64xf32>
      %108 = arith.index_cast %arg20 : i32 to index
      %c0_40 = arith.constant 0 : index
      %c0_41 = arith.constant 0 : index
      %109 = vector.load %arg14[%108, %c0_40, %c0_41] : memref<2x1x64xf32, #tpu.memory_space<vmem>>, vector<1x1x64xf32>
      %110 = vector.shape_cast %109 : vector<1x1x64xf32> to vector<1x64xf32>
      %111 = vector.broadcast %110 : vector<1x64xf32> to vector<16x64xf32>
      %112 = arith.addf %107, %111 : vector<16x64xf32>
      %113 = arith.truncf %112 : vector<16x64xf32> to vector<16x64xbf16>
      %114 = arith.index_cast %arg20 : i32 to index
      %c0_42 = arith.constant 0 : index
      %c0_43 = arith.constant 0 : index
      %115 = vector.load %arg9[%114, %c0_42, %c0_43] : memref<2x64x128xbf16, #tpu.memory_space<vmem>>, vector<1x64x128xbf16>
      %116 = vector.shape_cast %115 : vector<1x64x128xbf16> to vector<64x128xbf16>
      %cst_44 = arith.constant dense<0.000000e+00> : vector<16x128xf32>
      %117 = tpu.matmul %113, %116, %cst_44 {dimension_numbers = #tpu.dot_dimension_numbers<[1], [0], [0], [1], [0, 0, 1, 1], [], []>} : vector<16x64xbf16>, vector<64x128xbf16>, vector<16x128xf32> -> vector<16x128xf32>
      %118 = arith.index_cast %arg20 : i32 to index
      %c0_45 = arith.constant 0 : index
      %c0_46 = arith.constant 0 : index
      %119 = vector.load %arg10[%118, %c0_45, %c0_46] : memref<2x1x128xf32, #tpu.memory_space<vmem>>, vector<1x1x128xf32>
      %120 = vector.shape_cast %119 : vector<1x1x128xf32> to vector<1x128xf32>
      %121 = vector.broadcast %120 : vector<1x128xf32> to vector<16x128xf32>
      %122 = arith.addf %117, %121 : vector<16x128xf32>
      %cst_47 = arith.constant 0.000000e+00 : f32
      %123 = vector.broadcast %cst_47 : f32 to vector<16x128xf32>
      %124 = arith.maximumf %122, %123 : vector<16x128xf32>
      %125 = arith.truncf %124 : vector<16x128xf32> to vector<16x128xbf16>
      %126 = arith.index_cast %arg20 : i32 to index
      %c0_48 = arith.constant 0 : index
      %c0_49 = arith.constant 0 : index
      %127 = vector.load %arg11[%126, %c0_48, %c0_49] : memref<2x128x64xbf16, #tpu.memory_space<vmem>>, vector<1x128x64xbf16>
      %128 = vector.shape_cast %127 : vector<1x128x64xbf16> to vector<128x64xbf16>
      %cst_50 = arith.constant dense<0.000000e+00> : vector<16x64xf32>
      %129 = tpu.matmul %125, %128, %cst_50 {dimension_numbers = #tpu.dot_dimension_numbers<[1], [0], [0], [1], [0, 0, 1, 1], [], []>} : vector<16x128xbf16>, vector<128x64xbf16>, vector<16x64xf32> -> vector<16x64xf32>
      %130 = arith.index_cast %arg20 : i32 to index
      %c0_51 = arith.constant 0 : index
      %c0_52 = arith.constant 0 : index
      %131 = vector.load %arg12[%130, %c0_51, %c0_52] : memref<2x1x64xf32, #tpu.memory_space<vmem>>, vector<1x1x64xf32>
      %132 = vector.shape_cast %131 : vector<1x1x64xf32> to vector<1x64xf32>
      %133 = vector.broadcast %132 : vector<1x64xf32> to vector<16x64xf32>
      %134 = arith.addf %129, %133 : vector<16x64xf32>
      %135 = arith.addf %112, %134 : vector<16x64xf32>
      %cst_53 = arith.constant dense<0.000000e+00> : vector<16xf32>
      %136 = vector.multi_reduction <add>, %135, %cst_53 [1] : vector<16x64xf32> to vector<16xf32>
      %137 = vector.shape_cast %136 : vector<16xf32> to vector<16x1xf32>
      %cst_54 = arith.constant 6.400000e+01 : f32
      %138 = vector.broadcast %cst_54 : f32 to vector<16x1xf32>
      %139 = arith.divf %137, %138 : vector<16x1xf32>
      %140 = vector.broadcast %139 : vector<16x1xf32> to vector<16x64xf32>
      %141 = arith.subf %135, %140 : vector<16x64xf32>
      %142 = arith.mulf %141, %141 : vector<16x64xf32>
      %cst_55 = arith.constant dense<0.000000e+00> : vector<16xf32>
      %143 = vector.multi_reduction <add>, %142, %cst_55 [1] : vector<16x64xf32> to vector<16xf32>
      %144 = vector.shape_cast %143 : vector<16xf32> to vector<16x1xf32>
      %cst_56 = arith.constant 6.400000e+01 : f32
      %145 = vector.broadcast %cst_56 : f32 to vector<16x1xf32>
      %146 = arith.divf %144, %145 : vector<16x1xf32>
      %147 = vector.broadcast %139 : vector<16x1xf32> to vector<16x64xf32>
      %148 = arith.subf %135, %147 : vector<16x64xf32>
      %cst_57 = arith.constant 9.99999974E-6 : f32
      %149 = vector.broadcast %cst_57 : f32 to vector<16x1xf32>
      %150 = arith.addf %146, %149 : vector<16x1xf32>
      %151 = math.rsqrt %150 : vector<16x1xf32>
      %152 = vector.broadcast %151 : vector<16x1xf32> to vector<16x64xf32>
      %153 = arith.mulf %148, %152 : vector<16x64xf32>
      %154 = arith.index_cast %arg20 : i32 to index
      %c0_58 = arith.constant 0 : index
      %c0_59 = arith.constant 0 : index
      %155 = vector.load %arg15[%154, %c0_58, %c0_59] : memref<2x1x64xf32, #tpu.memory_space<vmem>>, vector<1x1x64xf32>
      %156 = vector.shape_cast %155 : vector<1x1x64xf32> to vector<1x64xf32>
      %157 = vector.broadcast %156 : vector<1x64xf32> to vector<16x64xf32>
      %158 = arith.mulf %153, %157 : vector<16x64xf32>
      %159 = arith.index_cast %arg20 : i32 to index
      %c0_60 = arith.constant 0 : index
      %c0_61 = arith.constant 0 : index
      %160 = vector.load %arg16[%159, %c0_60, %c0_61] : memref<2x1x64xf32, #tpu.memory_space<vmem>>, vector<1x1x64xf32>
      %161 = vector.shape_cast %160 : vector<1x1x64xf32> to vector<1x64xf32>
      %162 = vector.broadcast %161 : vector<1x64xf32> to vector<16x64xf32>
      %163 = arith.addf %158, %162 : vector<16x64xf32>
      scf.yield %163 : vector<16x64xf32>
    }
    %c2_i32_10 = arith.constant 2 : i32
    %18 = arith.truncf %17 : vector<16x64xf32> to vector<16x64xbf16>
    %c0_11 = arith.constant 0 : index
    %c0_12 = arith.constant 0 : index
    %19 = vector.load %arg17[%c0_11, %c0_12] : memref<64x128xbf16, #tpu.memory_space<vmem>>, vector<64x128xbf16>
    %cst_13 = arith.constant dense<0.000000e+00> : vector<16x128xf32>
    %20 = tpu.matmul %18, %19, %cst_13 {dimension_numbers = #tpu.dot_dimension_numbers<[1], [0], [0], [1], [0, 0, 1, 1], [], []>} : vector<16x64xbf16>, vector<64x128xbf16>, vector<16x128xf32> -> vector<16x128xf32>
    %c0_14 = arith.constant 0 : index
    %c0_15 = arith.constant 0 : index
    %21 = vector.load %arg18[%c0_14, %c0_15] : memref<1x128xf32, #tpu.memory_space<vmem>>, vector<1x128xf32>
    %22 = vector.broadcast %21 : vector<1x128xf32> to vector<16x128xf32>
    %23 = arith.addf %20, %22 : vector<16x128xf32>
    %c0_16 = arith.constant 0 : index
    %c0_17 = arith.constant 0 : index
    %24 = vector.load %arg19[%c0_16, %c0_17] : memref<16x128xf32, #tpu.memory_space<vmem>>, vector<16x128xf32>
    tpu.vector_store %arg19[%c0_16, %c0_17], %23 {strides = array<i32>} : memref<16x128xf32, #tpu.memory_space<vmem>>, vector<16x128xf32>,
    return
  }
}

</mosaic_0001>

<llo_original>
// kernel: tile.8
$region0: #{tile.8}
  #allocation0 [shape = 's32[1]{0}', space=sflag, size = 0x4, scoped, tag = 'scoped memory for tile.8']
  %s0 = inlined_call_operand.vmem [shape: f32[16], index: 0, kind: input, shape index: {}]
  %s1 = inlined_call_operand.vmem [shape: f32[4,16], index: 1, kind: output, shape index: {}]
  // Predicated region
  $region2: #{tile.8} parent=0 // pred_check
    _
  $region3: #{tile.8} parent=0 // pred_check_branch
    %3 = sbr.rel (0) target = $region5
  $region4: #{tile.8} parent=0 // pred_region
    _
  $region5: #{tile.8} parent=0 // pred_fallthru
    _
  %v4 = vld [vmem:[%s0] ss:$0 sm:$0xff]
  %5 = vst [vmem:[%s1] sm:$0xf] %v4

// kernel: tile.9
$region0: #{tile.9}
  %s0 = inlined_call_operand.vmem [shape: f32[4,16], index: 0, kind: input, shape index: {}]
  %s1 = inlined_call_operand.vmem [shape: f32[1,64], index: 1, kind: output, shape index: {}]
  $region1: #{tile.9} parent=0
    #allocation0 [shape = 'u8[4096]{0}', space=vmem, size = 0x1000, scoped, tag = 'scoped mem for output reshape']
    #allocation1 [shape = 'u8[4096]{0}', space=vmem, size = 0x1000, scoped, tag = 'scoped mem for input reshape']
    %s3 = sshll.u32 1, 4
    %s4 = ssub.s32 %s3, 1
    %v5 = vld [vmem:[%s0] sm:%s4]
    %6 = vst [vmem:[#allocation1] sm:%s4] %v5
    %v7 = vld [vmem:[#allocation1] sm:$0x1]
    %vm8 = vcmask 130048
    %9 = vst.msk [vmem:[#allocation0] sm:$0x1] %vm8, %v7
    %s10 = scalar_lea.vmem [#allocation1], 3
    %v11 = vld [vmem:[%s10] sm:$0x1]
    %12 = vrot.lane.b32.xlu0 %v11, 48
    %v13 = vpop.permute.xlu0 %12
    %vm14 = vcmask 523648
    %15 = vst.msk [vmem:[#allocation0] sm:$0x1] %vm14, %v13
    %s16 = scalar_lea.vmem [#allocation1], 2
    %v17 = vld [vmem:[%s16] sm:$0x1]
    %18 = vrot.lane.b32.xlu0 %v17, 32
    %v19 = vpop.permute.xlu0 %18
    %vm20 = vcmask 392448
    %21 = vst.msk [vmem:[#allocation0] sm:$0x1] %vm20, %v19
    %s22 = scalar_lea.vmem [#allocation1], 1
    %v23 = vld [vmem:[%s22] sm:$0x1]
    %24 = vrot.lane.b32.xlu0 %v23, 16
    %v25 = vpop.permute.xlu0 %24
    %vm26 = vcmask 261248
    %27 = vst.msk [vmem:[#allocation0] sm:$0x1] %vm26, %v25
    %s29 = sshll.u32 1, 1
    %s30 = ssub.s32 %s29, 1
    %v32 = vld [vmem:[#allocation0] sm:%s30]
    %s33 = sshll.u32 1, 1
    %s34 = ssub.s32 %s33, 1
    %35 = vst [vmem:[%s1] sm:%s34] %v32

// kernel: decoder_transformer_forward.1
$region0: #{decoder_transformer_forward.1}
  #allocation0 [shape = 'u32[]', space=smem, size = 0x4, offset = 0x4, fixed_abs, tag = 'smem constant byte address 0x4 - core index']
  #allocation1 [shape = 'u32[144,128]{1,0:T(1,128)}', space=vmem, size = 0x12000, scoped, tag = 'internal scratch']
  %s0 = inlined_call_operand.vmem [shape: f32[16,64], index: 0, kind: input, shape index: {}]
  %s1 = inlined_call_operand.vmem [shape: f32[8,8], index: 1, kind: input, shape index: {}]
  %s2 = inlined_call_operand.vmem [shape: f32[1,64], index: 2, kind: input, shape index: {}]
  %s3 = inlined_call_operand.vmem [shape: s32[64,1], index: 3, kind: input, shape index: {}]
  %s4 = inlined_call_operand.vmem [shape: s32[1,64], index: 4, kind: input, shape index: {}]
  %s5 = inlined_call_operand.vmem [shape: bf16[2,64,192], index: 5, kind: input, shape index: {}]
  %s6 = inlined_call_operand.vmem [shape: f32[2,1,192], index: 6, kind: input, shape index: {}]
  %s7 = inlined_call_operand.vmem [shape: bf16[2,64,64], index: 7, kind: input, shape index: {}]
  %s8 = inlined_call_operand.vmem [shape: f32[2,1,64], index: 8, kind: input, shape index: {}]
  %s9 = inlined_call_operand.vmem [shape: bf16[2,64,128], index: 9, kind: input, shape index: {}]
  %s10 = inlined_call_operand.vmem [shape: f32[2,1,128], index: 10, kind: input, shape index: {}]
  %s11 = inlined_call_operand.vmem [shape: bf16[2,128,64], index: 11, kind: input, shape index: {}]
  %s12 = inlined_call_operand.vmem [shape: f32[2,1,64], index: 12, kind: input, shape index: {}]
  %s13 = inlined_call_operand.vmem [shape: f32[2,1,64], index: 13, kind: input, shape index: {}]
  %s14 = inlined_call_operand.vmem [shape: f32[2,1,64], index: 14, kind: input, shape index: {}]
  %s15 = inlined_call_operand.vmem [shape: f32[2,1,64], index: 15, kind: input, shape index: {}]
  %s16 = inlined_call_operand.vmem [shape: f32[2,1,64], index: 16, kind: input, shape index: {}]
  %s17 = inlined_call_operand.vmem [shape: bf16[64,128], index: 17, kind: input, shape index: {}]
  %s18 = inlined_call_operand.vmem [shape: f32[1,128], index: 18, kind: input, shape index: {}]
  %s19 = inlined_call_operand.vmem [shape: f32[16,128], index: 19, kind: output, shape index: {}]
  %s20 = sld [smem:[#allocation0]]
  $region93: #{decoder_transformer_forward.1} parent=0
    _
  %s22 = ssub.s32 1, %s20
  %s23 = scalar_select 0, %s22, %s20
  // Predicated region
  $region2: #{decoder_transformer_forward.1} parent=0 // pred_check
    _
  $region3: #{decoder_transformer_forward.1} parent=0 // pred_check_branch
    %25 = sbr.rel (0) target = $region5
  $region4: #{decoder_transformer_forward.1} parent=0 // pred_region
    _
  $region5: #{decoder_transformer_forward.1} parent=0 // pred_fallthru
    _
  // Predicated region
  $region6: #{decoder_transformer_forward.1} parent=0 // pred_check
    _
  $region7: #{decoder_transformer_forward.1} parent=0 // pred_check_branch
    %27 = sbr.rel (0) target = $region9
  $region8: #{decoder_transformer_forward.1} parent=0 // pred_region
    _
  $region9: #{decoder_transformer_forward.1} parent=0 // pred_fallthru
    _
  // Predicated region
  $region10: #{decoder_transformer_forward.1} parent=0 // pred_check
    _
  $region11: #{decoder_transformer_forward.1} parent=0 // pred_check_branch
    %29 = sbr.rel (0) target = $region13
  $region12: #{decoder_transformer_forward.1} parent=0 // pred_region
    _
  $region13: #{decoder_transformer_forward.1} parent=0 // pred_fallthru
    _
  // Predicated region
  $region14: #{decoder_transformer_forward.1} parent=0 // pred_check
    _
  $region15: #{decoder_transformer_forward.1} parent=0 // pred_check_branch
    %31 = sbr.rel (0) target = $region17
  $region16: #{decoder_transformer_forward.1} parent=0 // pred_region
    _
  $region17: #{decoder_transformer_forward.1} parent=0 // pred_fallthru
    _
  // Predicated region
  $region18: #{decoder_transformer_forward.1} parent=0 // pred_check
    _
  $region19: #{decoder_transformer_forward.1} parent=0 // pred_check_branch
    %33 = sbr.rel (0) target = $region21
  $region20: #{decoder_transformer_forward.1} parent=0 // pred_region
    _
  $region21: #{decoder_transformer_forward.1} parent=0 // pred_fallthru
    _
  // Predicated region
  $region22: #{decoder_transformer_forward.1} parent=0 // pred_check
    _
  $region23: #{decoder_transformer_forward.1} parent=0 // pred_check_branch
    %35 = sbr.rel (0) target = $region25
  $region24: #{decoder_transformer_forward.1} parent=0 // pred_region
    _
  $region25: #{decoder_transformer_forward.1} parent=0 // pred_fallthru
    _
  // Predicated region
  $region26: #{decoder_transformer_forward.1} parent=0 // pred_check
    _
  $region27: #{decoder_transformer_forward.1} parent=0 // pred_check_branch
    %37 = sbr.rel (0) target = $region29
  $region28: #{decoder_transformer_forward.1} parent=0 // pred_region
    _
  $region29: #{decoder_transformer_forward.1} parent=0 // pred_fallthru
    _
  // Predicated region
  $region30: #{decoder_transformer_forward.1} parent=0 // pred_check
    _
  $region31: #{decoder_transformer_forward.1} parent=0 // pred_check_branch
    %39 = sbr.rel (0) target = $region33
  $region32: #{decoder_transformer_forward.1} parent=0 // pred_region
    _
  $region33: #{decoder_transformer_forward.1} parent=0 // pred_fallthru
    _
  // Predicated region
  $region34: #{decoder_transformer_forward.1} parent=0 // pred_check
    _
  $region35: #{decoder_transformer_forward.1} parent=0 // pred_check_branch
    %41 = sbr.rel (0) target = $region37
  $region36: #{decoder_transformer_forward.1} parent=0 // pred_region
    _
  $region37: #{decoder_transformer_forward.1} parent=0 // pred_fallthru
    _
  // Predicated region
  $region38: #{decoder_transformer_forward.1} parent=0 // pred_check
    _
  $region39: #{decoder_transformer_forward.1} parent=0 // pred_check_branch
    %43 = sbr.rel (0) target = $region41
  $region40: #{decoder_transformer_forward.1} parent=0 // pred_region
    _
  $region41: #{decoder_transformer_forward.1} parent=0 // pred_fallthru
    _
  // Predicated region
  $region42: #{decoder_transformer_forward.1} parent=0 // pred_check
    _
  $region43: #{decoder_transformer_forward.1} parent=0 // pred_check_branch
    %45 = sbr.rel (0) target = $region45
  $region44: #{decoder_transformer_forward.1} parent=0 // pred_region
    _
  $region45: #{decoder_transformer_forward.1} parent=0 // pred_fallthru
    _
  // Predicated region
  $region46: #{decoder_transformer_forward.1} parent=0 // pred_check
    _
  $region47: #{decoder_transformer_forward.1} parent=0 // pred_check_branch
    %47 = sbr.rel (0) target = $region49
  $region48: #{decoder_transformer_forward.1} parent=0 // pred_region
    _
  $region49: #{decoder_transformer_forward.1} parent=0 // pred_fallthru
    _
  // Predicated region
  $region50: #{decoder_transformer_forward.1} parent=0 // pred_check
    _
  $region51: #{decoder_transformer_forward.1} parent=0 // pred_check_branch
    %49 = sbr.rel (0) target = $region53
  $region52: #{decoder_transformer_forward.1} parent=0 // pred_region
    _
  $region53: #{decoder_transformer_forward.1} parent=0 // pred_fallthru
    _
  // Predicated region
  $region54: #{decoder_transformer_forward.1} parent=0 // pred_check
    _
  $region55: #{decoder_transformer_forward.1} parent=0 // pred_check_branch
    %51 = sbr.rel (0) target = $region57
  $region56: #{decoder_transformer_forward.1} parent=0 // pred_region
    _
  $region57: #{decoder_transformer_forward.1} parent=0 // pred_fallthru
    _
  // Predicated region
  $region58: #{decoder_transformer_forward.1} parent=0 // pred_check
    _
  $region59: #{decoder_transformer_forward.1} parent=0 // pred_check_branch
    %53 = sbr.rel (0) target = $region61
  $region60: #{decoder_transformer_forward.1} parent=0 // pred_region
    _
  $region61: #{decoder_transformer_forward.1} parent=0 // pred_fallthru
    _
  // Predicated region
  $region62: #{decoder_transformer_forward.1} parent=0 // pred_check
    _
  $region63: #{decoder_transformer_forward.1} parent=0 // pred_check_branch
    %55 = sbr.rel (0) target = $region65
  $region64: #{decoder_transformer_forward.1} parent=0 // pred_region
    _
  $region65: #{decoder_transformer_forward.1} parent=0 // pred_fallthru
    _
  // Predicated region
  $region66: #{decoder_transformer_forward.1} parent=0 // pred_check
    _
  $region67: #{decoder_transformer_forward.1} parent=0 // pred_check_branch
    %57 = sbr.rel (0) target = $region69
  $region68: #{decoder_transformer_forward.1} parent=0 // pred_region
    _
  $region69: #{decoder_transformer_forward.1} parent=0 // pred_fallthru
    _
  // Predicated region
  $region70: #{decoder_transformer_forward.1} parent=0 // pred_check
    _
  $region71: #{decoder_transformer_forward.1} parent=0 // pred_check_branch
    %59 = sbr.rel (0) target = $region73
  $region72: #{decoder_transformer_forward.1} parent=0 // pred_region
    _
  $region73: #{decoder_transformer_forward.1} parent=0 // pred_fallthru
    _
  // Predicated region
  $region74: #{decoder_transformer_forward.1} parent=0 // pred_check
    _
  $region75: #{decoder_transformer_forward.1} parent=0 // pred_check_branch
    %61 = sbr.rel (0) target = $region77
  $region76: #{decoder_transformer_forward.1} parent=0 // pred_region
    _
  $region77: #{decoder_transformer_forward.1} parent=0 // pred_fallthru
    _
  %v63 = vld [vmem:[%s1] sm:$0xff]
  %65 = vrot.lane.b32.xlu0 %v63, 8
  %v66 = vpop.permute.xlu0 %65
  %68 = vrot.lane.b32.xlu0 %v63, 16
  %v69 = vpop.permute.xlu0 %68
  %71 = vrot.lane.b32.xlu0 %v63, 24
  %v72 = vpop.permute.xlu0 %71
  %74 = vrot.lane.b32.xlu0 %v63, 32
  %v75 = vpop.permute.xlu0 %74
  %77 = vrot.lane.b32.xlu0 %v63, 40
  %v78 = vpop.permute.xlu0 %77
  %80 = vrot.lane.b32.xlu0 %v63, 48
  %v81 = vpop.permute.xlu0 %80
  %83 = vrot.lane.b32.xlu0 %v63, 56
  %v84 = vpop.permute.xlu0 %83
  %vm86 = vcmask 64512
  %v87 = vsel %vm86, %v63, %v66
  %vm88 = vcmask 130048
  %v89 = vsel %vm88, %v87, %v69
  %vm90 = vcmask 195584
  %v91 = vsel %vm90, %v89, %v72
  %vm92 = vcmask 261120
  %v93 = vsel %vm92, %v91, %v75
  %vm94 = vcmask 326656
  %v95 = vsel %vm94, %v93, %v78
  %vm96 = vcmask 392192
  %v97 = vsel %vm96, %v95, %v81
  %vm98 = vcmask 457728
  %v99 = vsel %vm98, %v97, %v84
  %v100 = vld [vmem:[%s3] sm:$0xff]
  %v101 = vld [vmem:[%s3 + $0x8] sm:$0xff]
  %v102 = vld [vmem:[%s3 + $0x10] sm:$0xff]
  %v103 = vld [vmem:[%s3 + $0x18] sm:$0xff]
  %v104 = vld [vmem:[%s3 + $0x20] sm:$0xff]
  %v105 = vld [vmem:[%s3 + $0x28] sm:$0xff]
  %v106 = vld [vmem:[%s3 + $0x30] sm:$0xff]
  %v107 = vld [vmem:[%s3 + $0x38] sm:$0xff]
  %v108 = vld [vmem:[%s4] sm:$0x1]
  %109 = vset.pattern.permute.xlu0 0
  %110 = vperm.xlu0 %109, %v100
  %v111 = vpop.permute.xlu0 %110
  %112 = vset.pattern.permute.xlu0 0
  %113 = vperm.xlu0 %112, %v101
  %v114 = vpop.permute.xlu0 %113
  %115 = vset.pattern.permute.xlu0 0
  %116 = vperm.xlu0 %115, %v102
  %v117 = vpop.permute.xlu0 %116
  %118 = vset.pattern.permute.xlu0 0
  %119 = vperm.xlu0 %118, %v103
  %v120 = vpop.permute.xlu0 %119
  %121 = vset.pattern.permute.xlu0 0
  %122 = vperm.xlu0 %121, %v104
  %v123 = vpop.permute.xlu0 %122
  %124 = vset.pattern.permute.xlu0 0
  %125 = vperm.xlu0 %124, %v105
  %v126 = vpop.permute.xlu0 %125
  %127 = vset.pattern.permute.xlu0 0
  %128 = vperm.xlu0 %127, %v106
  %v129 = vpop.permute.xlu0 %128
  %130 = vset.pattern.permute.xlu0 0
  %131 = vperm.xlu0 %130, %v107
  %v132 = vpop.permute.xlu0 %131
  %v133 = vlaneseq
  %v134 = vshrl.u32 %v133, 7
  %v135 = vsub.s32 0, %v134
  %v136 = vrot.slane %v108, %v135
  %vm137 = vcmp.eq.s32.totalorder %v111, %v136
  %vm138 = vcmp.eq.s32.totalorder %v114, %v136
  %vm139 = vcmp.eq.s32.totalorder %v117, %v136
  %vm140 = vcmp.eq.s32.totalorder %v120, %v136
  %vm141 = vcmp.eq.s32.totalorder %v123, %v136
  %vm142 = vcmp.eq.s32.totalorder %v126, %v136
  %vm143 = vcmp.eq.s32.totalorder %v129, %v136
  %vm144 = vcmp.eq.s32.totalorder %v132, %v136
  %v145 = vsel %vm137, 0.0, -3e+09
  %v146 = vsel %vm138, 0.0, -3e+09
  %v147 = vsel %vm139, 0.0, -3e+09
  %v148 = vsel %vm140, 0.0, -3e+09
  %v149 = vsel %vm141, 0.0, -3e+09
  %v150 = vsel %vm142, 0.0, -3e+09
  %v151 = vsel %vm143, 0.0, -3e+09
  %v152 = vsel %vm144, 0.0, -3e+09
  %v153 = vadd.f32 %v99, %v145
  %v154 = vadd.f32 %v99, %v146
  %v155 = vadd.f32 %v99, %v147
  %v156 = vadd.f32 %v99, %v148
  %v157 = vadd.f32 %v99, %v149
  %v158 = vadd.f32 %v99, %v150
  %v159 = vadd.f32 %v99, %v151
  %v160 = vadd.f32 %v99, %v152
  %v161 = vld [vmem:[%s2] sm:$0x1]
  %v163 = vlaneseq
  %v164 = vshrl.u32 %v163, 7
  %v165 = vsub.s32 0, %v164
  %v166 = vrot.slane %v161, %v165
  %v168 = vadd.f32 %v153, %v166
  %v169 = vadd.f32 %v154, %v166
  %v170 = vadd.f32 %v155, %v166
  %v171 = vadd.f32 %v156, %v166
  %v172 = vadd.f32 %v157, %v166
  %v173 = vadd.f32 %v158, %v166
  %v174 = vadd.f32 %v159, %v166
  %v175 = vadd.f32 %v160, %v166
  %v176 = vld [vmem:[%s0] sm:$0xff]
  %v177 = vld [vmem:[%s0 + $0x8] sm:$0xff]
  loop: start=0, step=1, limit=2
  $region78: #{decoder_transformer_forward.1} parent=0 // loop_pre_header
    _
  $region79: #{decoder_transformer_forward.1} parent=0 // loop_header
    %s179 = sphi 0, %s183
    %p180 = scmp.ge.s32.totalorder %s179, 2
    %v184 = vphi %v176, %v1051
    %v185 = vphi %v177, %v1052
  $region80: #{decoder_transformer_forward.1} parent=0 // loop_header_branch
    %182 = sbr.rel (%p180) target = $region84
  $region81: #{decoder_transformer_forward.1} parent=0 // loop_body
    %v186 = vpack.c.bf16 %v185, %v184
    %s187 = smul.u32 %s179, 16
    %s188 = smul.addr %s187, 4
    %s189 = scalar_lea.vmem %s5, %s188
    %v190 = vld [vmem:[%s189] sm:$0xff]
    %v191 = vld [vmem:[%s189 + $0x8] sm:$0xff]
    %v192 = vld [vmem:[%s189 + $0x10] sm:$0xff]
    %v193 = vld [vmem:[%s189 + $0x18] sm:$0xff]
    %v194 = vld [vmem:[%s189 + $0x20] sm:$0xff]
    %v195 = vld [vmem:[%s189 + $0x28] sm:$0xff]
    %v196 = vld [vmem:[%s189 + $0x30] sm:$0xff]
    %v197 = vld [vmem:[%s189 + $0x38] sm:$0xff]
    %s198 = smul.u32 %s179, 2
    %s199 = scalar_lea.vmem %s6, %s198
    %v200 = vld [vmem:[%s199] sm:$0x3]
    %v202 = vlaneseq
    %v203 = vshrl.u32 %v202, 7
    %v204 = vsub.s32 0, %v203
    %v205 = vrot.slane %v200, %v204
    %v206 = vlaneseq
    %v207 = vshrl.u32 %v206, 7
    %v208 = vsub.s32 1, %v207
    %v209 = vrot.slane %v200, %v208
    %v220 = vunpack.c.l.b16 %v190
    %v221 = vunpack.c.h.b16 %v190
    %v222 = vunpack.c.l.b16 %v191
    %v223 = vunpack.c.h.b16 %v191
    %v224 = vunpack.c.l.b16 %v192
    %v225 = vunpack.c.h.b16 %v192
    %v226 = vunpack.c.l.b16 %v193
    %v227 = vunpack.c.h.b16 %v193
    %v228 = vunpack.c.l.b16 %v194
    %v229 = vunpack.c.h.b16 %v194
    %v230 = vunpack.c.l.b16 %v195
    %v231 = vunpack.c.h.b16 %v195
    %v232 = vunpack.c.l.b16 %v196
    %v233 = vunpack.c.h.b16 %v196
    %v234 = vunpack.c.l.b16 %v197
    %v235 = vunpack.c.h.b16 %v197
    %v236 = vpack.c.b16 %v222, %v220
    %v237 = vpack.c.b16 %v223, %v221
    %v238 = vpack.c.b16 %v226, %v224
    %v239 = vpack.c.b16 %v227, %v225
    %v240 = vpack.c.b16 %v230, %v228
    %v241 = vpack.c.b16 %v231, %v229
    %v242 = vpack.c.b16 %v234, %v232
    %v243 = vpack.c.b16 %v235, %v233
    %vm252 = vcmask 523264
    %v254 = vsel %vm252, %v186, 0
    %256 = vmatprep.subr.bf16.mxu0 0
    %257 = vmatpush1.bf16.msra.mxu0 0
    %258 = vmatprep.subr.bf16.mxu0 0
    %259 = vmatpush1.bf16.msra.mxu0 0
    %260 = vmatprep.subr.bf16.mxu0 0
    %261 = vmatpush1.bf16.msra.mxu0 0
    %262 = vmatprep.subr.bf16.mxu0 0
    %263 = vmatpush1.bf16.msra.mxu0 0
    %264 = vmatprep.subr.bf16.mxu0 %v243
    %265 = vmatpush1.bf16.msra.mxu0 %v242
    %266 = vmatprep.subr.bf16.mxu0 %v241
    %267 = vmatpush1.bf16.msra.mxu0 %v240
    %268 = vmatprep.subr.bf16.mxu0 %v239
    %269 = vmatpush1.bf16.msra.mxu0 %v238
    %270 = vmatprep.subr.bf16.mxu0 %v237
    %271 = vmatpush1.bf16.msra.mxu0 %v236
    %272 = vmatprep.subr.bf16.mxu0 0
    %273 = vmatpush2.bf16.msra.mxu0 0
    %274 = vmatprep.subr.bf16.mxu0 0
    %275 = vmatpush2.bf16.msra.mxu0 0
    %276 = vmatprep.subr.bf16.mxu0 0
    %277 = vmatpush2.bf16.msra.mxu0 0
    %278 = vmatprep.subr.bf16.mxu0 0
    %279 = vmatpush2.bf16.msra.mxu0 0
    %280 = vmatprep.subr.bf16.mxu0 0
    %281 = vmatpush2.bf16.msra.mxu0 0
    %282 = vmatprep.subr.bf16.mxu0 0
    %283 = vmatpush2.bf16.msra.mxu0 0
    %284 = vmatprep.subr.bf16.mxu0 0
    %285 = vmatpush2.bf16.msra.mxu0 0
    %286 = vmatprep.subr.bf16.mxu0 0
    %287 = vmatpush2.bf16.msra.mxu0 0
    %288 = vmatprep.mubr.bf16.mxu0 0
    %289 = vmatmul.mubr.bf16.gmra.mxu0 %v254
    %v290 = vpop.f32.mrf.mxu0
    %v291 = vadd.f32 %v205, %v290
    %v292 = vpop.f32.mrf.mxu0
    %v293 = vadd.f32 %v209, %v292
    %v294 = vpop.f32.mrf.mxu0
    %v295 = vadd.f32 %v205, %v294
    %v296 = vpop.f32.mrf.mxu0
    %v297 = vadd.f32 %v209, %v296
    %298 = vdwg.mxu0
    %301 = vrot.lane.b32.xlu0 %v291, 112
    %v302 = vpop.permute.xlu0 %301
    %303 = vrot.lane.b32.xlu0 %v295, 112
    %v304 = vpop.permute.xlu0 %303
    %307 = vrot.lane.b32.xlu0 %v291, 96
    %v308 = vpop.permute.xlu0 %307
    %309 = vrot.lane.b32.xlu0 %v295, 96
    %v310 = vpop.permute.xlu0 %309
    %313 = vrot.lane.b32.xlu0 %v291, 80
    %v314 = vpop.permute.xlu0 %313
    %315 = vrot.lane.b32.xlu0 %v295, 80
    %v316 = vpop.permute.xlu0 %315
    %v319 = vpack.c.bf16 %v295, %v291
    %v320 = vpack.c.bf16 %v304, %v302
    %v321 = vpack.c.bf16 %v310, %v308
    %v322 = vpack.c.bf16 %v316, %v314
    %325 = vrot.lane.b32.xlu0 %v293, 112
    %v326 = vpop.permute.xlu0 %325
    %327 = vrot.lane.b32.xlu0 %v297, 112
    %v328 = vpop.permute.xlu0 %327
    %331 = vrot.lane.b32.xlu0 %v293, 96
    %v332 = vpop.permute.xlu0 %331
    %333 = vrot.lane.b32.xlu0 %v297, 96
    %v334 = vpop.permute.xlu0 %333
    %337 = vrot.lane.b32.xlu0 %v293, 80
    %v338 = vpop.permute.xlu0 %337
    %339 = vrot.lane.b32.xlu0 %v297, 80
    %v340 = vpop.permute.xlu0 %339
    %v343 = vpack.c.bf16 %v297, %v293
    %v344 = vpack.c.bf16 %v328, %v326
    %v345 = vpack.c.bf16 %v334, %v332
    %v346 = vpack.c.bf16 %v340, %v338
    %351 = vrot.lane.b32.xlu0 %v319, 64
    %v352 = vpop.permute.xlu0 %351
    %353 = vrot.lane.b32.xlu0 %v320, 64
    %v354 = vpop.permute.xlu0 %353
    %355 = vrot.lane.b32.xlu0 %v321, 64
    %v356 = vpop.permute.xlu0 %355
    %357 = vrot.lane.b32.xlu0 %v322, 64
    %v358 = vpop.permute.xlu0 %357
    %v360 = vsel %vm88, %v319, 0
    %v363 = vsel %vm88, %v320, 0
    %v366 = vsel %vm88, %v321, 0
    %v369 = vsel %vm88, %v322, 0
    %v372 = vsel %vm88, %v352, 0
    %v375 = vsel %vm88, %v354, 0
    %v378 = vsel %vm88, %v356, 0
    %v381 = vsel %vm88, %v358, 0
    %383 = vmatprep.subr.bf16.mxu0 0
    %384 = vmatpush1.bf16.xpose.msra.mxu0 0
    %385 = vmatprep.subr.bf16.mxu0 0
    %386 = vmatpush1.bf16.xpose.msra.mxu0 0
    %387 = vmatprep.subr.bf16.mxu0 0
    %388 = vmatpush1.bf16.xpose.msra.mxu0 0
    %389 = vmatprep.subr.bf16.mxu0 0
    %390 = vmatpush1.bf16.xpose.msra.mxu0 0
    %391 = vmatprep.subr.bf16.mxu0 0
    %392 = vmatpush1.bf16.xpose.msra.mxu0 %v381
    %393 = vmatprep.subr.bf16.mxu0 0
    %394 = vmatpush1.bf16.xpose.msra.mxu0 %v378
    %395 = vmatprep.subr.bf16.mxu0 0
    %396 = vmatpush1.bf16.xpose.msra.mxu0 %v375
    %397 = vmatprep.subr.bf16.mxu0 0
    %398 = vmatpush1.bf16.xpose.msra.mxu0 %v372
    %399 = vmatprep.subr.bf16.mxu0 0
    %400 = vmatpush2.bf16.xpose.msra.mxu0 0
    %401 = vmatprep.subr.bf16.mxu0 0
    %402 = vmatpush2.bf16.xpose.msra.mxu0 0
    %403 = vmatprep.subr.bf16.mxu0 0
    %404 = vmatpush2.bf16.xpose.msra.mxu0 0
    %405 = vmatprep.subr.bf16.mxu0 0
    %406 = vmatpush2.bf16.xpose.msra.mxu0 0
    %407 = vmatprep.subr.bf16.mxu0 0
    %408 = vmatpush2.bf16.xpose.msra.mxu0 0
    %409 = vmatprep.subr.bf16.mxu0 0
    %410 = vmatpush2.bf16.xpose.msra.mxu0 0
    %411 = vmatprep.subr.bf16.mxu0 0
    %412 = vmatpush2.bf16.xpose.msra.mxu0 0
    %413 = vmatprep.subr.bf16.mxu0 0
    %414 = vmatpush2.bf16.xpose.msra.mxu0 0
    %415 = vmatprep.mubr.bf16.mxu0 0
    %416 = vmatmul.mubr.bf16.gmra.mxu0 %v360
    %v417 = vpop.f32.mrf.mxu0
    %v418 = vadd.f32 0.0, %v417
    %v419 = vpop.f32.mrf.mxu0
    %v420 = vpop.f32.mrf.mxu0
    %v421 = vadd.f32 0.0, %v420
    %v422 = vpop.f32.mrf.mxu0
    %423 = vmatprep.mubr.bf16.mxu0 0
    %424 = vmatmul.mubr.bf16.gmra.mxu0 %v363
    %v425 = vpop.f32.mrf.mxu0
    %v426 = vadd.f32 0.0, %v425
    %v427 = vpop.f32.mrf.mxu0
    %v428 = vpop.f32.mrf.mxu0
    %v429 = vadd.f32 0.0, %v428
    %v430 = vpop.f32.mrf.mxu0
    %431 = vmatprep.mubr.bf16.mxu0 0
    %432 = vmatmul.mubr.bf16.gmra.mxu0 %v366
    %v433 = vpop.f32.mrf.mxu0
    %v434 = vadd.f32 0.0, %v433
    %v435 = vpop.f32.mrf.mxu0
    %v436 = vpop.f32.mrf.mxu0
    %v437 = vadd.f32 0.0, %v436
    %v438 = vpop.f32.mrf.mxu0
    %439 = vmatprep.mubr.bf16.mxu0 0
    %440 = vmatmul.mubr.bf16.gmra.mxu0 %v369
    %v441 = vpop.f32.mrf.mxu0
    %v442 = vadd.f32 0.0, %v441
    %v443 = vpop.f32.mrf.mxu0
    %v444 = vpop.f32.mrf.mxu0
    %v445 = vadd.f32 0.0, %v444
    %v446 = vpop.f32.mrf.mxu0
    %447 = vdwg.mxu0
    %v448 = vmul.f32 %v418, 0.25
    %v449 = vmul.f32 %v421, 0.25
    %v450 = vmul.f32 %v426, 0.25
    %v451 = vmul.f32 %v429, 0.25
    %v452 = vmul.f32 %v434, 0.25
    %v453 = vmul.f32 %v437, 0.25
    %v454 = vmul.f32 %v442, 0.25
    %v455 = vmul.f32 %v445, 0.25
    %v456 = vadd.f32 %v448, %v168
    %v457 = vadd.f32 %v449, %v169
    %v458 = vadd.f32 %v450, %v170
    %v459 = vadd.f32 %v451, %v171
    %v460 = vadd.f32 %v452, %v172
    %v461 = vadd.f32 %v453, %v173
    %v462 = vadd.f32 %v454, %v174
    %v463 = vadd.f32 %v455, %v175
    %v464 = vsel %vm252, %v456, -inf
    %465 = vmax.xlane.f32.xlu0 %v464
    %v466 = vpop.xlane.xlu0 %465
    %v467 = vsel %vm252, %v457, -inf
    %468 = vmax.xlane.f32.xlu0 %v467
    %v469 = vpop.xlane.xlu0 %468
    %v470 = vsel %vm252, %v458, -inf
    %471 = vmax.xlane.f32.xlu0 %v470
    %v472 = vpop.xlane.xlu0 %471
    %v473 = vsel %vm252, %v459, -inf
    %474 = vmax.xlane.f32.xlu0 %v473
    %v475 = vpop.xlane.xlu0 %474
    %v476 = vsel %vm252, %v460, -inf
    %477 = vmax.xlane.f32.xlu0 %v476
    %v478 = vpop.xlane.xlu0 %477
    %v479 = vsel %vm252, %v461, -inf
    %480 = vmax.xlane.f32.xlu0 %v479
    %v481 = vpop.xlane.xlu0 %480
    %v482 = vsel %vm252, %v462, -inf
    %483 = vmax.xlane.f32.xlu0 %v482
    %v484 = vpop.xlane.xlu0 %483
    %v485 = vsel %vm252, %v463, -inf
    %486 = vmax.xlane.f32.xlu0 %v485
    %v487 = vpop.xlane.xlu0 %486
    %v488 = vsub.f32 %v456, %v466
    %v489 = vsub.f32 %v457, %v469
    %v490 = vsub.f32 %v458, %v472
    %v491 = vsub.f32 %v459, %v475
    %v492 = vsub.f32 %v460, %v478
    %v493 = vsub.f32 %v461, %v481
    %v494 = vsub.f32 %v462, %v484
    %v495 = vsub.f32 %v463, %v487
    %v496 = vmul.f32 %v488, 1.442695
    %v497 = vpow.pop %v496
    %v498 = vmul.f32 %v489, 1.442695
    %v499 = vpow.pop %v498
    %v500 = vmul.f32 %v490, 1.442695
    %v501 = vpow.pop %v500
    %v502 = vmul.f32 %v491, 1.442695
    %v503 = vpow.pop %v502
    %v504 = vmul.f32 %v492, 1.442695
    %v505 = vpow.pop %v504
    %v506 = vmul.f32 %v493, 1.442695
    %v507 = vpow.pop %v506
    %v508 = vmul.f32 %v494, 1.442695
    %v509 = vpow.pop %v508
    %v510 = vmul.f32 %v495, 1.442695
    %v511 = vpow.pop %v510
    %v512 = vsel %vm252, %v497, 0.0
    %513 = vadd.xlane.f32.xlu0 %v512
    %v514 = vpop.xlane.xlu0 %513
    %v515 = vsel %vm252, %v499, 0.0
    %516 = vadd.xlane.f32.xlu0 %v515
    %v517 = vpop.xlane.xlu0 %516
    %v518 = vsel %vm252, %v501, 0.0
    %519 = vadd.xlane.f32.xlu0 %v518
    %v520 = vpop.xlane.xlu0 %519
    %v521 = vsel %vm252, %v503, 0.0
    %522 = vadd.xlane.f32.xlu0 %v521
    %v523 = vpop.xlane.xlu0 %522
    %v524 = vsel %vm252, %v505, 0.0
    %525 = vadd.xlane.f32.xlu0 %v524
    %v526 = vpop.xlane.xlu0 %525
    %v527 = vsel %vm252, %v507, 0.0
    %528 = vadd.xlane.f32.xlu0 %v527
    %v529 = vpop.xlane.xlu0 %528
    %v530 = vsel %vm252, %v509, 0.0
    %531 = vadd.xlane.f32.xlu0 %v530
    %v532 = vpop.xlane.xlu0 %531
    %v533 = vsel %vm252, %v511, 0.0
    %534 = vadd.xlane.f32.xlu0 %v533
    %v535 = vpop.xlane.xlu0 %534
    %v536 = vrcp.pop %v514
    %v537 = vrcp.pop %v517
    %v538 = vrcp.pop %v520
    %v539 = vrcp.pop %v523
    %v540 = vrcp.pop %v526
    %v541 = vrcp.pop %v529
    %v542 = vrcp.pop %v532
    %v543 = vrcp.pop %v535
    %v544 = vmul.f32 %v497, %v536
    %v545 = vmul.f32 %v499, %v537
    %v546 = vmul.f32 %v501, %v538
    %v547 = vmul.f32 %v503, %v539
    %v548 = vmul.f32 %v505, %v540
    %v549 = vmul.f32 %v507, %v541
    %v550 = vmul.f32 %v509, %v542
    %v551 = vmul.f32 %v511, %v543
    %v552 = vpack.c.bf16 %v545, %v544
    %v553 = vpack.c.bf16 %v547, %v546
    %v554 = vpack.c.bf16 %v549, %v548
    %v555 = vpack.c.bf16 %v551, %v550
    %v557 = vsel %vm252, %v552, 0
    %v560 = vsel %vm252, %v553, 0
    %v563 = vsel %vm252, %v554, 0
    %v566 = vsel %vm252, %v555, 0
    %568 = vmatprep.subr.bf16.mxu0 0
    %569 = vmatpush1.bf16.msra.mxu0 0
    %570 = vmatprep.subr.bf16.mxu0 0
    %571 = vmatpush1.bf16.msra.mxu0 0
    %572 = vmatprep.subr.bf16.mxu0 0
    %573 = vmatpush1.bf16.msra.mxu0 0
    %574 = vmatprep.subr.bf16.mxu0 0
    %575 = vmatpush1.bf16.msra.mxu0 0
    %576 = vmatprep.subr.bf16.mxu0 0
    %577 = vmatpush1.bf16.msra.mxu0 %v346
    %578 = vmatprep.subr.bf16.mxu0 0
    %579 = vmatpush1.bf16.msra.mxu0 %v345
    %580 = vmatprep.subr.bf16.mxu0 0
    %581 = vmatpush1.bf16.msra.mxu0 %v344
    %582 = vmatprep.subr.bf16.mxu0 0
    %583 = vmatpush1.bf16.msra.mxu0 %v343
    %584 = vmatprep.subr.bf16.mxu0 0
    %585 = vmatpush2.bf16.msra.mxu0 0
    %586 = vmatprep.subr.bf16.mxu0 0
    %587 = vmatpush2.bf16.msra.mxu0 0
    %588 = vmatprep.subr.bf16.mxu0 0
    %589 = vmatpush2.bf16.msra.mxu0 0
    %590 = vmatprep.subr.bf16.mxu0 0
    %591 = vmatpush2.bf16.msra.mxu0 0
    %592 = vmatprep.subr.bf16.mxu0 0
    %593 = vmatpush2.bf16.msra.mxu0 0
    %594 = vmatprep.subr.bf16.mxu0 0
    %595 = vmatpush2.bf16.msra.mxu0 0
    %596 = vmatprep.subr.bf16.mxu0 0
    %597 = vmatpush2.bf16.msra.mxu0 0
    %598 = vmatprep.subr.bf16.mxu0 0
    %599 = vmatpush2.bf16.msra.mxu0 0
    %600 = vmatprep.mubr.bf16.mxu0 0
    %601 = vmatmul.mubr.bf16.gmra.mxu0 %v557
    %v602 = vpop.f32.mrf.mxu0
    %v603 = vadd.f32 0.0, %v602
    %v604 = vpop.f32.mrf.mxu0
    %v605 = vpop.f32.mrf.mxu0
    %v606 = vadd.f32 0.0, %v605
    %v607 = vpop.f32.mrf.mxu0
    %608 = vmatprep.mubr.bf16.mxu0 0
    %609 = vmatmul.mubr.bf16.gmra.mxu0 %v560
    %v610 = vpop.f32.mrf.mxu0
    %v611 = vadd.f32 0.0, %v610
    %v612 = vpop.f32.mrf.mxu0
    %v613 = vpop.f32.mrf.mxu0
    %v614 = vadd.f32 0.0, %v613
    %v615 = vpop.f32.mrf.mxu0
    %616 = vmatprep.mubr.bf16.mxu0 0
    %617 = vmatmul.mubr.bf16.gmra.mxu0 %v563
    %v618 = vpop.f32.mrf.mxu0
    %v619 = vadd.f32 0.0, %v618
    %v620 = vpop.f32.mrf.mxu0
    %v621 = vpop.f32.mrf.mxu0
    %v622 = vadd.f32 0.0, %v621
    %v623 = vpop.f32.mrf.mxu0
    %624 = vmatprep.mubr.bf16.mxu0 0
    %625 = vmatmul.mubr.bf16.gmra.mxu0 %v566
    %v626 = vpop.f32.mrf.mxu0
    %v627 = vadd.f32 0.0, %v626
    %v628 = vpop.f32.mrf.mxu0
    %v629 = vpop.f32.mrf.mxu0
    %v630 = vadd.f32 0.0, %v629
    %v631 = vpop.f32.mrf.mxu0
    %632 = vdwg.mxu0
    %635 = vrot.lane.b32.xlu0 %v611, 16
    %v636 = vpop.permute.xlu0 %635
    %637 = vrot.lane.b32.xlu0 %v614, 16
    %v638 = vpop.permute.xlu0 %637
    %643 = vrot.lane.b32.xlu0 %v619, 32
    %v644 = vpop.permute.xlu0 %643
    %645 = vrot.lane.b32.xlu0 %v622, 32
    %v646 = vpop.permute.xlu0 %645
    %651 = vrot.lane.b32.xlu0 %v627, 48
    %v652 = vpop.permute.xlu0 %651
    %653 = vrot.lane.b32.xlu0 %v630, 48
    %v654 = vpop.permute.xlu0 %653
    %v657 = vsel %vm88, %v603, %v636
    %v658 = vsel %vm88, %v606, %v638
    %v659 = vsel %vm92, %v657, %v644
    %v660 = vsel %vm92, %v658, %v646
    %v661 = vsel %vm96, %v659, %v652
    %v662 = vsel %vm96, %v660, %v654
    %v663 = vpack.c.bf16 %v662, %v661
    %s664 = smul.u32 %s179, 8
    %s665 = smul.addr %s664, 4
    %s666 = scalar_lea.vmem %s7, %s665
    %v667 = vld [vmem:[%s666] sm:$0xf]
    %v668 = vld [vmem:[%s666 + $0x4] sm:$0xf]
    %v669 = vld [vmem:[%s666 + $0x8] sm:$0xf]
    %v670 = vld [vmem:[%s666 + $0xc] sm:$0xf]
    %v671 = vld [vmem:[%s666 + $0x10] sm:$0xf]
    %v672 = vld [vmem:[%s666 + $0x14] sm:$0xf]
    %v673 = vld [vmem:[%s666 + $0x18] sm:$0xf]
    %v674 = vld [vmem:[%s666 + $0x1c] sm:$0xf]
    %s675 = scalar_lea.vmem %s8, %s179
    %v676 = vld [vmem:[%s675] sm:$0x1]
    %v678 = vlaneseq
    %v679 = vshrl.u32 %v678, 7
    %v680 = vsub.s32 0, %v679
    %v681 = vrot.slane %v676, %v680
    %v691 = vunpack.c.l.b16 %v667
    %v692 = vunpack.c.l.b16 %v668
    %v693 = vunpack.c.l.b16 %v669
    %v694 = vunpack.c.l.b16 %v670
    %v695 = vunpack.c.l.b16 %v671
    %v696 = vunpack.c.l.b16 %v672
    %v697 = vunpack.c.l.b16 %v673
    %v698 = vunpack.c.l.b16 %v674
    %v699 = vpack.c.b16 %v692, %v691
    %v700 = vpack.c.b16 %v694, %v693
    %v701 = vpack.c.b16 %v696, %v695
    %v702 = vpack.c.b16 %v698, %v697
    %v708 = vsel %vm252, %v663, 0
    %710 = vmatprep.subr.bf16.mxu0 0
    %711 = vmatpush1.bf16.msra.mxu0 0
    %712 = vmatprep.subr.bf16.mxu0 0
    %713 = vmatpush1.bf16.msra.mxu0 0
    %714 = vmatprep.subr.bf16.mxu0 0
    %715 = vmatpush1.bf16.msra.mxu0 0
    %716 = vmatprep.subr.bf16.mxu0 0
    %717 = vmatpush1.bf16.msra.mxu0 0
    %718 = vmatprep.subr.bf16.mxu0 0
    %719 = vmatpush1.bf16.msra.mxu0 %v702
    %720 = vmatprep.subr.bf16.mxu0 0
    %721 = vmatpush1.bf16.msra.mxu0 %v701
    %722 = vmatprep.subr.bf16.mxu0 0
    %723 = vmatpush1.bf16.msra.mxu0 %v700
    %724 = vmatprep.subr.bf16.mxu0 0
    %725 = vmatpush1.bf16.msra.mxu0 %v699
    %726 = vmatprep.subr.bf16.mxu0 0
    %727 = vmatpush2.bf16.msra.mxu0 0
    %728 = vmatprep.subr.bf16.mxu0 0
    %729 = vmatpush2.bf16.msra.mxu0 0
    %730 = vmatprep.subr.bf16.mxu0 0
    %731 = vmatpush2.bf16.msra.mxu0 0
    %732 = vmatprep.subr.bf16.mxu0 0
    %733 = vmatpush2.bf16.msra.mxu0 0
    %734 = vmatprep.subr.bf16.mxu0 0
    %735 = vmatpush2.bf16.msra.mxu0 0
    %736 = vmatprep.subr.bf16.mxu0 0
    %737 = vmatpush2.bf16.msra.mxu0 0
    %738 = vmatprep.subr.bf16.mxu0 0
    %739 = vmatpush2.bf16.msra.mxu0 0
    %740 = vmatprep.subr.bf16.mxu0 0
    %741 = vmatpush2.bf16.msra.mxu0 0
    %742 = vmatprep.mubr.bf16.mxu0 0
    %743 = vmatmul.mubr.bf16.gmra.mxu0 %v708
    %v744 = vpop.f32.mrf.mxu0
    %v745 = vadd.f32 %v681, %v744
    %v746 = vpop.f32.mrf.mxu0
    %v747 = vpop.f32.mrf.mxu0
    %v748 = vadd.f32 %v681, %v747
    %v749 = vpop.f32.mrf.mxu0
    %750 = vdwg.mxu0
    %v751 = vadd.f32 %v184, %v745
    %v752 = vadd.f32 %v185, %v748
    %v753 = vsel %vm252, %v751, 0.0
    %754 = vadd.xlane.f32.xlu0 %v753
    %v755 = vpop.xlane.xlu0 %754
    %v756 = vsel %vm252, %v752, 0.0
    %757 = vadd.xlane.f32.xlu0 %v756
    %v758 = vpop.xlane.xlu0 %757
    %v759 = vrcp.pop 64.0
    %v760 = vmul.f32 %v755, %v759
    %v761 = vmul.f32 %v758, %v759
    %v762 = vsub.f32 %v751, %v760
    %v763 = vsub.f32 %v752, %v761
    %v764 = vmul.f32 %v762, %v762
    %v765 = vmul.f32 %v763, %v763
    %v766 = vsel %vm252, %v764, 0.0
    %767 = vadd.xlane.f32.xlu0 %v766
    %v768 = vpop.xlane.xlu0 %767
    %v769 = vsel %vm252, %v765, 0.0
    %770 = vadd.xlane.f32.xlu0 %v769
    %v771 = vpop.xlane.xlu0 %770
    %v772 = vmul.f32 %v768, %v759
    %v773 = vmul.f32 %v771, %v759
    %v774 = vadd.f32 %v772, 1e-05
    %v775 = vadd.f32 %v773, 1e-05
    %v776 = vrsqrt.pop %v774
    %v777 = vrsqrt.pop %v775
    %v778 = vmul.f32 %v762, %v776
    %v779 = vmul.f32 %v763, %v777
    %s780 = scalar_lea.vmem %s13, %s179
    %v781 = vld [vmem:[%s780] sm:$0x1]
    %v783 = vlaneseq
    %v784 = vshrl.u32 %v783, 7
    %v785 = vsub.s32 0, %v784
    %v786 = vrot.slane %v781, %v785
    %v788 = vmul.f32 %v778, %v786
    %v789 = vmul.f32 %v779, %v786
    %s790 = scalar_lea.vmem %s14, %s179
    %v791 = vld [vmem:[%s790] sm:$0x1]
    %v793 = vlaneseq
    %v794 = vshrl.u32 %v793, 7
    %v795 = vsub.s32 0, %v794
    %v796 = vrot.slane %v791, %v795
    %v798 = vadd.f32 %v788, %v796
    %v799 = vadd.f32 %v789, %v796
    %v800 = vpack.c.bf16 %v799, %v798
    %s801 = smul.addr %s664, 4
    %s802 = scalar_lea.vmem %s9, %s801
    %v803 = vld [vmem:[%s802] sm:$0xf]
    %v804 = vld [vmem:[%s802 + $0x4] sm:$0xf]
    %v805 = vld [vmem:[%s802 + $0x8] sm:$0xf]
    %v806 = vld [vmem:[%s802 + $0xc] sm:$0xf]
    %v807 = vld [vmem:[%s802 + $0x10] sm:$0xf]
    %v808 = vld [vmem:[%s802 + $0x14] sm:$0xf]
    %v809 = vld [vmem:[%s802 + $0x18] sm:$0xf]
    %v810 = vld [vmem:[%s802 + $0x1c] sm:$0xf]
    %s811 = scalar_lea.vmem %s10, %s179
    %v812 = vld [vmem:[%s811] sm:$0x1]
    %v814 = vlaneseq
    %v815 = vshrl.u32 %v814, 7
    %v816 = vsub.s32 0, %v815
    %v817 = vrot.slane %v812, %v816
    %v827 = vunpack.c.l.b16 %v803
    %v828 = vunpack.c.l.b16 %v804
    %v829 = vunpack.c.l.b16 %v805
    %v830 = vunpack.c.l.b16 %v806
    %v831 = vunpack.c.l.b16 %v807
    %v832 = vunpack.c.l.b16 %v808
    %v833 = vunpack.c.l.b16 %v809
    %v834 = vunpack.c.l.b16 %v810
    %v835 = vpack.c.b16 %v828, %v827
    %v836 = vpack.c.b16 %v830, %v829
    %v837 = vpack.c.b16 %v832, %v831
    %v838 = vpack.c.b16 %v834, %v833
    %v844 = vsel %vm252, %v800, 0
    %846 = vmatprep.subr.bf16.mxu0 0
    %847 = vmatpush1.bf16.msra.mxu0 0
    %848 = vmatprep.subr.bf16.mxu0 0
    %849 = vmatpush1.bf16.msra.mxu0 0
    %850 = vmatprep.subr.bf16.mxu0 0
    %851 = vmatpush1.bf16.msra.mxu0 0
    %852 = vmatprep.subr.bf16.mxu0 0
    %853 = vmatpush1.bf16.msra.mxu0 0
    %854 = vmatprep.subr.bf16.mxu0 0
    %855 = vmatpush1.bf16.msra.mxu0 %v838
    %856 = vmatprep.subr.bf16.mxu0 0
    %857 = vmatpush1.bf16.msra.mxu0 %v837
    %858 = vmatprep.subr.bf16.mxu0 0
    %859 = vmatpush1.bf16.msra.mxu0 %v836
    %860 = vmatprep.subr.bf16.mxu0 0
    %861 = vmatpush1.bf16.msra.mxu0 %v835
    %862 = vmatprep.subr.bf16.mxu0 0
    %863 = vmatpush2.bf16.msra.mxu0 0
    %864 = vmatprep.subr.bf16.mxu0 0
    %865 = vmatpush2.bf16.msra.mxu0 0
    %866 = vmatprep.subr.bf16.mxu0 0
    %867 = vmatpush2.bf16.msra.mxu0 0
    %868 = vmatprep.subr.bf16.mxu0 0
    %869 = vmatpush2.bf16.msra.mxu0 0
    %870 = vmatprep.subr.bf16.mxu0 0
    %871 = vmatpush2.bf16.msra.mxu0 0
    %872 = vmatprep.subr.bf16.mxu0 0
    %873 = vmatpush2.bf16.msra.mxu0 0
    %874 = vmatprep.subr.bf16.mxu0 0
    %875 = vmatpush2.bf16.msra.mxu0 0
    %876 = vmatprep.subr.bf16.mxu0 0
    %877 = vmatpush2.bf16.msra.mxu0 0
    %878 = vmatprep.mubr.bf16.mxu0 0
    %879 = vmatmul.mubr.bf16.gmra.mxu0 %v844
    %v880 = vpop.f32.mrf.mxu0
    %v881 = vadd.f32 %v817, %v880
    %v882 = vpop.f32.mrf.mxu0
    %v883 = vpop.f32.mrf.mxu0
    %v884 = vadd.f32 %v817, %v883
    %v885 = vpop.f32.mrf.mxu0
    %886 = vdwg.mxu0
    %v887 = vmax.f32 %v881, 0.0
    %v888 = vmax.f32 %v884, 0.0
    %v889 = vpack.c.bf16 %v888, %v887
    %s890 = smul.addr %s187, 4
    %s891 = scalar_lea.vmem %s11, %s890
    %v892 = vld [vmem:[%s891] sm:$0xf]
    %v893 = vld [vmem:[%s891 + $0x4] sm:$0xf]
    %v894 = vld [vmem:[%s891 + $0x8] sm:$0xf]
    %v895 = vld [vmem:[%s891 + $0xc] sm:$0xf]
    %v896 = vld [vmem:[%s891 + $0x10] sm:$0xf]
    %v897 = vld [vmem:[%s891 + $0x14] sm:$0xf]
    %v898 = vld [vmem:[%s891 + $0x18] sm:$0xf]
    %v899 = vld [vmem:[%s891 + $0x1c] sm:$0xf]
    %v900 = vld [vmem:[%s891 + $0x20] sm:$0xf]
    %v901 = vld [vmem:[%s891 + $0x24] sm:$0xf]
    %v902 = vld [vmem:[%s891 + $0x28] sm:$0xf]
    %v903 = vld [vmem:[%s891 + $0x2c] sm:$0xf]
    %v904 = vld [vmem:[%s891 + $0x30] sm:$0xf]
    %v905 = vld [vmem:[%s891 + $0x34] sm:$0xf]
    %v906 = vld [vmem:[%s891 + $0x38] sm:$0xf]
    %v907 = vld [vmem:[%s891 + $0x3c] sm:$0xf]
    %s908 = scalar_lea.vmem %s12, %s179
    %v909 = vld [vmem:[%s908] sm:$0x1]
    %v911 = vlaneseq
    %v912 = vshrl.u32 %v911, 7
    %v913 = vsub.s32 0, %v912
    %v914 = vrot.slane %v909, %v913
    %v932 = vunpack.c.l.b16 %v892
    %v933 = vunpack.c.l.b16 %v893
    %v934 = vunpack.c.l.b16 %v894
    %v935 = vunpack.c.l.b16 %v895
    %v936 = vunpack.c.l.b16 %v896
    %v937 = vunpack.c.l.b16 %v897
    %v938 = vunpack.c.l.b16 %v898
    %v939 = vunpack.c.l.b16 %v899
    %v940 = vunpack.c.l.b16 %v900
    %v941 = vunpack.c.l.b16 %v901
    %v942 = vunpack.c.l.b16 %v902
    %v943 = vunpack.c.l.b16 %v903
    %v944 = vunpack.c.l.b16 %v904
    %v945 = vunpack.c.l.b16 %v905
    %v946 = vunpack.c.l.b16 %v906
    %v947 = vunpack.c.l.b16 %v907
    %v948 = vpack.c.b16 %v933, %v932
    %v949 = vpack.c.b16 %v935, %v934
    %v950 = vpack.c.b16 %v937, %v936
    %v951 = vpack.c.b16 %v939, %v938
    %v952 = vpack.c.b16 %v941, %v940
    %v953 = vpack.c.b16 %v943, %v942
    %v954 = vpack.c.b16 %v945, %v944
    %v955 = vpack.c.b16 %v947, %v946
    %964 = vmatprep.subr.bf16.mxu0 0
    %965 = vmatpush1.bf16.msra.mxu0 %v955
    %966 = vmatprep.subr.bf16.mxu0 0
    %967 = vmatpush1.bf16.msra.mxu0 %v954
    %968 = vmatprep.subr.bf16.mxu0 0
    %969 = vmatpush1.bf16.msra.mxu0 %v953
    %970 = vmatprep.subr.bf16.mxu0 0
    %971 = vmatpush1.bf16.msra.mxu0 %v952
    %972 = vmatprep.subr.bf16.mxu0 0
    %973 = vmatpush1.bf16.msra.mxu0 %v951
    %974 = vmatprep.subr.bf16.mxu0 0
    %975 = vmatpush1.bf16.msra.mxu0 %v950
    %976 = vmatprep.subr.bf16.mxu0 0
    %977 = vmatpush1.bf16.msra.mxu0 %v949
    %978 = vmatprep.subr.bf16.mxu0 0
    %979 = vmatpush1.bf16.msra.mxu0 %v948
    %980 = vmatprep.subr.bf16.mxu0 0
    %981 = vmatpush2.bf16.msra.mxu0 0
    %982 = vmatprep.subr.bf16.mxu0 0
    %983 = vmatpush2.bf16.msra.mxu0 0
    %984 = vmatprep.subr.bf16.mxu0 0
    %985 = vmatpush2.bf16.msra.mxu0 0
    %986 = vmatprep.subr.bf16.mxu0 0
    %987 = vmatpush2.bf16.msra.mxu0 0
    %988 = vmatprep.subr.bf16.mxu0 0
    %989 = vmatpush2.bf16.msra.mxu0 0
    %990 = vmatprep.subr.bf16.mxu0 0
    %991 = vmatpush2.bf16.msra.mxu0 0
    %992 = vmatprep.subr.bf16.mxu0 0
    %993 = vmatpush2.bf16.msra.mxu0 0
    %994 = vmatprep.subr.bf16.mxu0 0
    %995 = vmatpush2.bf16.msra.mxu0 0
    %996 = vmatprep.mubr.bf16.mxu0 0
    %997 = vmatmul.mubr.bf16.gmra.mxu0 %v889
    %v998 = vpop.f32.mrf.mxu0
    %v999 = vadd.f32 %v914, %v998
    %v1000 = vpop.f32.mrf.mxu0
    %v1001 = vpop.f32.mrf.mxu0
    %v1002 = vadd.f32 %v914, %v1001
    %v1003 = vpop.f32.mrf.mxu0
    %1004 = vdwg.mxu0
    %v1005 = vadd.f32 %v798, %v999
    %v1006 = vadd.f32 %v799, %v1002
    %v1007 = vsel %vm252, %v1005, 0.0
    %1008 = vadd.xlane.f32.xlu0 %v1007
    %v1009 = vpop.xlane.xlu0 %1008
    %v1010 = vsel %vm252, %v1006, 0.0
    %1011 = vadd.xlane.f32.xlu0 %v1010
    %v1012 = vpop.xlane.xlu0 %1011
    %v1013 = vmul.f32 %v1009, %v759
    %v1014 = vmul.f32 %v1012, %v759
    %v1015 = vsub.f32 %v1005, %v1013
    %v1016 = vsub.f32 %v1006, %v1014
    %v1017 = vmul.f32 %v1015, %v1015
    %v1018 = vmul.f32 %v1016, %v1016
    %v1019 = vsel %vm252, %v1017, 0.0
    %1020 = vadd.xlane.f32.xlu0 %v1019
    %v1021 = vpop.xlane.xlu0 %1020
    %v1022 = vsel %vm252, %v1018, 0.0
    %1023 = vadd.xlane.f32.xlu0 %v1022
    %v1024 = vpop.xlane.xlu0 %1023
    %v1025 = vmul.f32 %v1021, %v759
    %v1026 = vmul.f32 %v1024, %v759
    %v1027 = vadd.f32 %v1025, 1e-05
    %v1028 = vadd.f32 %v1026, 1e-05
    %v1029 = vrsqrt.pop %v1027
    %v1030 = vrsqrt.pop %v1028
    %v1031 = vmul.f32 %v1015, %v1029
    %v1032 = vmul.f32 %v1016, %v1030
    %s1033 = scalar_lea.vmem %s15, %s179
    %v1034 = vld [vmem:[%s1033] sm:$0x1]
    %v1036 = vlaneseq
    %v1037 = vshrl.u32 %v1036, 7
    %v1038 = vsub.s32 0, %v1037
    %v1039 = vrot.slane %v1034, %v1038
    %v1041 = vmul.f32 %v1031, %v1039
    %v1042 = vmul.f32 %v1032, %v1039
    %s1043 = scalar_lea.vmem %s16, %s179
    %v1044 = vld [vmem:[%s1043] sm:$0x1]
    %v1046 = vlaneseq
    %v1047 = vshrl.u32 %v1046, 7
    %v1048 = vsub.s32 0, %v1047
    %v1049 = vrot.slane %v1044, %v1048
    %v1051 = vadd.f32 %v1041, %v1049
    %v1052 = vadd.f32 %v1042, %v1049
  $region82: #{decoder_transformer_forward.1} parent=0 // loop_footer
    %s183 = sadd.s32 1, %s179
  $region83: #{decoder_transformer_forward.1} parent=0 // loop_footer_branch
    %178 = sbr.rel target = $region79
  $region84: #{decoder_transformer_forward.1} parent=0 // loop_exit
    _
  %v1053 = vpack.c.bf16 %v185, %v184
  %v1054 = vld [vmem:[%s17] sm:$0xf]
  %v1055 = vld [vmem:[%s17 + $0x4] sm:$0xf]
  %v1056 = vld [vmem:[%s17 + $0x8] sm:$0xf]
  %v1057 = vld [vmem:[%s17 + $0xc] sm:$0xf]
  %v1058 = vld [vmem:[%s17 + $0x10] sm:$0xf]
  %v1059 = vld [vmem:[%s17 + $0x14] sm:$0xf]
  %v1060 = vld [vmem:[%s17 + $0x18] sm:$0xf]
  %v1061 = vld [vmem:[%s17 + $0x1c] sm:$0xf]
  %v1062 = vld [vmem:[%s18] sm:$0x1]
  %v1064 = vlaneseq
  %v1065 = vshrl.u32 %v1064, 7
  %v1066 = vsub.s32 0, %v1065
  %v1067 = vrot.slane %v1062, %v1066
  %v1077 = vunpack.c.l.b16 %v1054
  %v1078 = vunpack.c.l.b16 %v1055
  %v1079 = vunpack.c.l.b16 %v1056
  %v1080 = vunpack.c.l.b16 %v1057
  %v1081 = vunpack.c.l.b16 %v1058
  %v1082 = vunpack.c.l.b16 %v1059
  %v1083 = vunpack.c.l.b16 %v1060
  %v1084 = vunpack.c.l.b16 %v1061
  %v1085 = vpack.c.b16 %v1078, %v1077
  %v1086 = vpack.c.b16 %v1080, %v1079
  %v1087 = vpack.c.b16 %v1082, %v1081
  %v1088 = vpack.c.b16 %v1084, %v1083
  %vm1093 = vcmask 523264
  %v1095 = vsel %vm1093, %v1053, 0
  %1097 = vmatprep.subr.bf16.mxu0 0
  %1098 = vmatpush1.bf16.msra.mxu0 0
  %1099 = vmatprep.subr.bf16.mxu0 0
  %1100 = vmatpush1.bf16.msra.mxu0 0
  %1101 = vmatprep.subr.bf16.mxu0 0
  %1102 = vmatpush1.bf16.msra.mxu0 0
  %1103 = vmatprep.subr.bf16.mxu0 0
  %1104 = vmatpush1.bf16.msra.mxu0 0
  %1105 = vmatprep.subr.bf16.mxu0 0
  %1106 = vmatpush1.bf16.msra.mxu0 %v1088
  %1107 = vmatprep.subr.bf16.mxu0 0
  %1108 = vmatpush1.bf16.msra.mxu0 %v1087
  %1109 = vmatprep.subr.bf16.mxu0 0
  %1110 = vmatpush1.bf16.msra.mxu0 %v1086
  %1111 = vmatprep.subr.bf16.mxu0 0
  %1112 = vmatpush1.bf16.msra.mxu0 %v1085
  %1113 = vmatprep.subr.bf16.mxu0 0
  %1114 = vmatpush2.bf16.msra.mxu0 0
  %1115 = vmatprep.subr.bf16.mxu0 0
  %1116 = vmatpush2.bf16.msra.mxu0 0
  %1117 = vmatprep.subr.bf16.mxu0 0
  %1118 = vmatpush2.bf16.msra.mxu0 0
  %1119 = vmatprep.subr.bf16.mxu0 0
  %1120 = vmatpush2.bf16.msra.mxu0 0
  %1121 = vmatprep.subr.bf16.mxu0 0
  %1122 = vmatpush2.bf16.msra.mxu0 0
  %1123 = vmatprep.subr.bf16.mxu0 0
  %1124 = vmatpush2.bf16.msra.mxu0 0
  %1125 = vmatprep.subr.bf16.mxu0 0
  %1126 = vmatpush2.bf16.msra.mxu0 0
  %1127 = vmatprep.subr.bf16.mxu0 0
  %1128 = vmatpush2.bf16.msra.mxu0 0
  %1129 = vmatprep.mubr.bf16.mxu0 0
  %1130 = vmatmul.mubr.bf16.gmra.mxu0 %v1095
  %v1131 = vpop.f32.mrf.mxu0
  %v1132 = vadd.f32 %v1067, %v1131
  %v1133 = vpop.f32.mrf.mxu0
  %v1134 = vpop.f32.mrf.mxu0
  %v1135 = vadd.f32 %v1067, %v1134
  %v1136 = vpop.f32.mrf.mxu0
  %1137 = vdwg.mxu0
  %1138 = vst [vmem:[%s19] sm:$0xff] %v1132
  %1139 = vst [vmem:[%s19 + $0x8] sm:$0xff] %v1135
  // Predicated region
  $region85: #{decoder_transformer_forward.1} parent=0 // pred_check
    _
  $region86: #{decoder_transformer_forward.1} parent=0 // pred_check_branch
    %1141 = sbr.rel (0) target = $region88
  $region87: #{decoder_transformer_forward.1} parent=0 // pred_region
    _
  $region88: #{decoder_transformer_forward.1} parent=0 // pred_fallthru
    _
  // Predicated region
  $region89: #{decoder_transformer_forward.1} parent=0 // pred_check
    _
  $region90: #{decoder_transformer_forward.1} parent=0 // pred_check_branch
    %1143 = sbr.rel (0) target = $region92
  $region91: #{decoder_transformer_forward.1} parent=0 // pred_region
    _
  $region92: #{decoder_transformer_forward.1} parent=0 // pred_fallthru
    _

</llo_original>
